<compile_context>
chip_gen: v7x
topology: tpu7x:2x2x1
jax: 0.10.0
libtpu: 0.0.40
codegen_flags: <defaults>
</compile_context>

<pallas_src>
import math

import numpy as np
import jax
import jax.numpy as jnp
from jax.experimental import pallas as pl
from jax.experimental.pallas import tpu as pltpu

SELU_ALPHA = 1.6732632423543772
SELU_SCALE = 1.0507009873554805
BN_EPS = 1e-5
LANES = 128

# Older/newer JAX compatibility for the TPU compiler-params class name.
_CompilerParams = getattr(pltpu, "CompilerParams", None)
if _CompilerParams is None:
    _CompilerParams = getattr(pltpu, "TPUCompilerParams")

_TM_CANDIDATES = (4096, 2048, 1024, 512, 256, 128, 64, 32, 16, 8)
_VMEM_CACHE = None


def _round_up(x, m):
    return (x + m - 1) // m * m


def _selu(z):
    # exp instead of expm1 (expm1 Mosaic lowering not guaranteed); clamp the exp
    # argument so the dead (positive) branch never produces inf.
    neg = SELU_ALPHA * (jnp.exp(jnp.minimum(z, 0.0)) - 1.0)
    return SELU_SCALE * jnp.where(z > 0.0, z, neg)


# ----------------------------------------------------------------------------
# VMEM budget / tiling helpers
# ----------------------------------------------------------------------------
def _vmem_budget():
    """(per-call tile budget, scoped vmem limit), generation-aware."""
    global _VMEM_CACHE
    if _VMEM_CACHE is None:
        cap = 64 * 1024 * 1024
        try:
            info = pltpu.get_tpu_info()
            cap = int(getattr(info, "vmem_capacity_bytes", cap))
        except Exception:
            pass
        if cap >= 96 * 1024 * 1024:        # v5e / v6e: 128 MiB physical VMEM
            _VMEM_CACHE = (72 * 1024 * 1024, 100 * 1024 * 1024)
        else:                              # v7x: 64 MiB physical VMEM
            _VMEM_CACHE = (24 * 1024 * 1024, 48 * 1024 * 1024)
    return _VMEM_CACHE


def _row_tile(m, per_row_bytes, fixed_bytes, budget):
    """Largest row tile dividing m that fits the budget; prefer >= 2 tiles so the
    pipeline double-buffers and the grid can shard across TensorCores."""
    avail = max(budget - fixed_bytes, 1 << 20)
    fits = [tm for tm in _TM_CANDIDATES if m % tm == 0 and tm * per_row_bytes <= avail]
    multi = [tm for tm in fits if m // tm >= 2]
    if multi:
        return multi[0]
    if fits:
        return fits[0]
    div = [tm for tm in _TM_CANDIDATES if m % tm == 0]
    return div[-1] if div else m           # degenerate fallback (shouldn't trigger)


def _k_candidates(kp):
    cands = [kp]
    for t in (4096, 2048, 1024, 512, 256, 128):
        if t < kp and kp % t == 0:
            cands.append(t)
    return cands


def _conv_tiling(m, kp, cp, n_w, budget, force_tk=None):
    """Pick (row tile tm, K tile tk). K is tiled only when a full-K row would
    shrink tm below the ~512-row pipelining knee."""
    cands = [force_tk] if force_tk is not None else _k_candidates(kp)
    results = []
    for tk in cands:
        # dbuf bf16 LHS rows + per-weight (dbuf bf16 y + f32 acc + f32 temp)
        per_row = 2 * tk * 2 + n_w * (2 * cp * 2 + cp * 8)
        # dbuf weights + stats blocks (small)
        fixed = n_w * 2 * tk * cp * 2 + n_w * 4 * cp * 4
        results.append((_row_tile(m, per_row, fixed, budget), tk))
    target = min(512, m)
    for tm, tk in results:                 # candidates ordered largest tk first
        if tm >= target:
            return tm, tk
    return max(results)


# ----------------------------------------------------------------------------
# Pallas kernels
# ----------------------------------------------------------------------------
def _make_conv_stats_kernel(n_w, multi_k):
    """One LHS tile read, n_w matmuls (f32 acc); emits y (bf16) and per-row-tile
    per-channel sum / sum-of-squares of the f32 results (BatchNorm statistics)."""

    def kernel(*refs):
        x_ref = refs[0]
        w_refs = refs[1:1 + n_w]
        y_refs = refs[1 + n_w:1 + 2 * n_w]
        st_refs = refs[1 + 2 * n_w:1 + 4 * n_w]
        acc_refs = refs[1 + 4 * n_w:]

        x = x_ref[...]                                        # bf16 (tm, tk)

        if not multi_k:
            for i in range(n_w):
                y = jnp.dot(x, w_refs[i][...], preferred_element_type=jnp.float32)
                y_refs[i][...] = y.astype(y_refs[i].dtype)
                st_refs[2 * i][...] = jnp.sum(y, axis=0, keepdims=True)[None]
                st_refs[2 * i + 1][...] = jnp.sum(y * y, axis=0, keepdims=True)[None]
        else:
            kt = pl.program_id(1)
            nk = pl.num_programs(1)

            @pl.when(kt == 0)
            def _init():
                for r in acc_refs:
                    r[...] = jnp.zeros_like(r)

            for i in range(n_w):
                acc_refs[i][...] += jnp.dot(x, w_refs[i][...],
                                            preferred_element_type=jnp.float32)

            @pl.when(kt == nk - 1)
            def _finalize():
                for i in range(n_w):
                    y = acc_refs[i][...]
                    y_refs[i][...] = y.astype(y_refs[i].dtype)
                    st_refs[2 * i][...] = jnp.sum(y, axis=0, keepdims=True)[None]
                    st_refs[2 * i + 1][...] = jnp.sum(y * y, axis=0, keepdims=True)[None]

    return kernel


def _make_bn_selu_kernel(n_t):
    """y = selu(x * scale + shift) for n_t independent tensors in one call."""

    def kernel(*refs):
        x_refs = refs[:n_t]
        sc_refs = refs[n_t:2 * n_t]
        sh_refs = refs[2 * n_t:3 * n_t]
        o_refs = refs[3 * n_t:]
        for i in range(n_t):
            z = x_refs[i][...].astype(jnp.float32) * sc_refs[i][...] + sh_refs[i][...]
            o_refs[i][...] = _selu(z).astype(o_refs[i].dtype)

    return kernel


def _bn_selu_add_stats_kernel(y1_ref, y2_ref, sc1_ref, sh1_ref, sc2_ref, sh2_ref,
                              s_ref, ssum_ref, sqsum_ref):
    """s = selu(y1*sc1+sh1) + selu(y2*sc2+sh2) (road1b BN+SELU, fused road2 BN+SELU,
    residual add), plus per-row-tile per-channel sum/sumsq of s (road3 BN stats)."""
    z1 = y1_ref[...].astype(jnp.float32) * sc1_ref[...] + sh1_ref[...]
    z2 = y2_ref[...].astype(jnp.float32) * sc2_ref[...] + sh2_ref[...]
    s = _selu(z1) + _selu(z2)
    s_ref[...] = s.astype(s_ref.dtype)
    ssum_ref[...] = jnp.sum(s, axis=0, keepdims=True)[None]
    sqsum_ref[...] = jnp.sum(s * s, axis=0, keepdims=True)[None]


# ----------------------------------------------------------------------------
# pallas_call wrappers
# ----------------------------------------------------------------------------
def conv_stats_pallas(xg, w_list, *, force_tk=None):
    m, kp = xg.shape
    cp = w_list[0].shape[1]
    n_w = len(w_list)
    budget, limit = _vmem_budget()
    tm, tk = _conv_tiling(m, kp, cp, n_w, budget, force_tk)
    nr, nk = m // tm, kp // tk
    multi_k = nk > 1

    if multi_k:
        grid = (nr, nk)
        xmap = lambda r, k: (r, k)
        wmap = lambda r, k: (k, 0)
        ymap = lambda r, k: (r, 0)
        smap = lambda r, k: (r, 0, 0)
        sems = ("parallel", "arbitrary")
        scratch = tuple(pltpu.VMEM((tm, cp), jnp.float32) for _ in range(n_w))
    else:
        grid = (nr,)
        xmap = lambda r: (r, 0)
        wmap = lambda r: (0, 0)
        ymap = lambda r: (r, 0)
        smap = lambda r: (r, 0, 0)
        sems = ("parallel",)
        scratch = ()

    in_specs = [pl.BlockSpec((tm, tk), xmap)]
    in_specs += [pl.BlockSpec((tk, cp), wmap) for _ in range(n_w)]
    out_shape = tuple([jax.ShapeDtypeStruct((m, cp), jnp.bfloat16) for _ in range(n_w)]
                      + [jax.ShapeDtypeStruct((nr, 1, cp), jnp.float32)
                         for _ in range(2 * n_w)])
    out_specs = tuple([pl.BlockSpec((tm, cp), ymap) for _ in range(n_w)]
                      + [pl.BlockSpec((1, 1, cp), smap) for _ in range(2 * n_w)])

    outs = pl.pallas_call(
        _make_conv_stats_kernel(n_w, multi_k),
        out_shape=out_shape,
        grid=grid,
        in_specs=in_specs,
        out_specs=out_specs,
        scratch_shapes=scratch,
        compiler_params=_CompilerParams(dimension_semantics=sems,
                                        vmem_limit_bytes=limit),
    )(xg, *w_list)
    ys = list(outs[:n_w])
    st = outs[n_w:]
    return ys, [(st[2 * i], st[2 * i + 1]) for i in range(n_w)]


def bn_selu_pallas(xs, scales, shifts, out_dtype=jnp.bfloat16):
    n_t = len(xs)
    m, cp = xs[0].shape
    budget, limit = _vmem_budget()
    out_b = jnp.dtype(out_dtype).itemsize
    per_row = n_t * (2 * cp * 2 + 2 * cp * out_b + cp * 4)
    tm = _row_tile(m, per_row, 4 * n_t * cp * 4, budget)
    rmap = lambda r: (r, 0)
    cmap = lambda r: (0, 0)
    in_specs = ([pl.BlockSpec((tm, cp), rmap) for _ in range(n_t)]
                + [pl.BlockSpec((1, cp), cmap) for _ in range(2 * n_t)])
    out_specs = tuple(pl.BlockSpec((tm, cp), rmap) for _ in range(n_t))
    out_shape = tuple(jax.ShapeDtypeStruct((m, cp), out_dtype) for _ in range(n_t))
    outs = pl.pallas_call(
        _make_bn_selu_kernel(n_t),
        out_shape=out_shape,
        grid=(m // tm,),
        in_specs=in_specs,
        out_specs=out_specs,
        compiler_params=_CompilerParams(dimension_semantics=("parallel",),
                                        vmem_limit_bytes=limit),
    )(*xs, *scales, *shifts)
    if not isinstance(outs, (tuple, list)):
        outs = (outs,)
    return tuple(outs)


def bn_selu_add_stats_pallas(y1, y2, sc1, sh1, sc2, sh2):
    m, cp = y1.shape
    budget, limit = _vmem_budget()
    per_row = 2 * (2 * cp * 2) + 2 * cp * 2 + 4 * cp * 4
    tm = _row_tile(m, per_row, 8 * cp * 4, budget)
    nr = m // tm
    rmap = lambda r: (r, 0)
    cmap = lambda r: (0, 0)
    smap = lambda r: (r, 0, 0)
    return pl.pallas_call(
        _bn_selu_add_stats_kernel,
        out_shape=(jax.ShapeDtypeStruct((m, cp), jnp.bfloat16),
                   jax.ShapeDtypeStruct((nr, 1, cp), jnp.float32),
                   jax.ShapeDtypeStruct((nr, 1, cp), jnp.float32)),
        grid=(nr,),
        in_specs=[pl.BlockSpec((tm, cp), rmap),
                  pl.BlockSpec((tm, cp), rmap),
                  pl.BlockSpec((1, cp), cmap),
                  pl.BlockSpec((1, cp), cmap),
                  pl.BlockSpec((1, cp), cmap),
                  pl.BlockSpec((1, cp), cmap)],
        out_specs=(pl.BlockSpec((tm, cp), rmap),
                   pl.BlockSpec((1, 1, cp), smap),
                   pl.BlockSpec((1, 1, cp), smap)),
        compiler_params=_CompilerParams(dimension_semantics=("parallel",),
                                        vmem_limit_bytes=limit),
    )(y1, y2, sc1, sh1, sc2, sh2)


def _bn_affine(ssum, sqsum, m_rows, gamma_p, beta_p):
    """Training-mode BatchNorm (biased variance) folded to one scale/shift per channel.
    NOTE: E[x^2]-E[x]^2 in f32 can cancel when |mean| >> std; acceptable here since
    conv outputs are ~zero-mean (documented correctness caveat)."""
    s = jnp.sum(ssum, axis=0)                    # (1, CP)
    q = jnp.sum(sqsum, axis=0)
    mean = s / float(m_rows)
    var = jnp.maximum(q / float(m_rows) - mean * mean, 0.0)
    inv = jax.lax.rsqrt(var + BN_EPS)
    scale = gamma_p * inv
    shift = beta_p - mean * scale
    return scale.astype(jnp.float32), shift.astype(jnp.float32)


# ----------------------------------------------------------------------------
# Spherical-grid index precomputation (deterministic numpy glue)
# ----------------------------------------------------------------------------
def _rot_zyz(a, b, g):
    ca, sa = np.cos(a), np.sin(a)
    cb, sb = np.cos(b), np.sin(b)
    cg, sg = np.cos(g), np.sin(g)
    R = np.empty(np.broadcast(a, b, g).shape + (3, 3))
    R[..., 0, 0] = ca * cb * cg - sa * sg
    R[..., 0, 1] = -ca * cb * sg - sa * cg
    R[..., 0, 2] = ca * sb
    R[..., 1, 0] = sa * cb * cg + ca * sg
    R[..., 1, 1] = -sa * cb * sg + ca * cg
    R[..., 1, 2] = sa * sb
    R[..., 2, 0] = -sb * cg
    R[..., 2, 1] = sb * sg
    R[..., 2, 2] = cb
    return R


def _soft_grid_rotations(b):
    n = 2 * b
    beta = np.pi * (2.0 * np.arange(n) + 1.0) / (4.0 * b)
    alpha = np.pi * np.arange(n) / b
    gamma = np.pi * np.arange(n) / b
    B, A, G = np.meshgrid(beta, alpha, gamma, indexing="ij")
    return _rot_zyz(A, B, G).reshape(n ** 3, 3, 3)


def _so3_gather_indices(b_in, b_out):
    Rout = _soft_grid_rotations(b_out)
    t = 2 * b_in
    a_t = 2.0 * np.pi * np.arange(t) / t
    Rk = _rot_zyz(a_t, np.full(t, np.pi / 2.0), -a_t)
    M = np.einsum("sij,tjk->stik", Rout, Rk)
    cb = np.clip(M[..., 2, 2], -1.0, 1.0)
    beta_p = np.arccos(cb)
    sinb = np.sqrt(np.maximum(0.0, 1.0 - cb * cb))
    deg = sinb < 1e-6
    alpha_p = np.where(deg, np.arctan2(M[..., 1, 0], M[..., 0, 0]),
                       np.arctan2(M[..., 1, 2], M[..., 0, 2]))
    gamma_p = np.where(deg, 0.0, np.arctan2(M[..., 2, 1], -M[..., 2, 0]))
    n = 2 * b_in
    k_idx = np.clip(np.rint(beta_p * n / np.pi - 0.5).astype(np.int64), 0, n - 1)
    a_idx = np.rint(alpha_p * b_in / np.pi).astype(np.int64) % n
    g_idx = np.rint(gamma_p * b_in / np.pi).astype(np.int64) % n
    return (k_idx * n * n + a_idx * n + g_idx).astype(np.int32)


def _s2_gather_indices(b_in, b_out):
    Rout = _soft_grid_rotations(b_out)
    t = 2 * b_in
    a_t = 2.0 * np.pi * np.arange(t) / t
    p = np.stack([np.cos(a_t), np.sin(a_t), np.zeros(t)], axis=-1)
    q = np.einsum("sij,tj->sti", Rout, p)
    beta_p = np.arccos(np.clip(q[..., 2], -1.0, 1.0))
    alpha_p = np.arctan2(q[..., 1], q[..., 0])
    n = 2 * b_in
    k_idx = np.clip(np.rint(beta_p * n / np.pi - 0.5).astype(np.int64), 0, n - 1)
    a_idx = np.rint(alpha_p * b_in / np.pi).astype(np.int64) % n
    return (k_idx * n + a_idx).astype(np.int32)


# ----------------------------------------------------------------------------
# Conv parameter init + im2col glue
# ----------------------------------------------------------------------------
def _init_conv(key, c_in, c_out, b_in, b_out, conv_type, cp):
    t = 2 * b_in
    w = jax.random.uniform(key, (c_in, c_out, t), dtype=jnp.float32,
                           minval=-1.0, maxval=1.0)
    if conv_type == "S2":
        scaling = 1.0 / math.sqrt(t * c_in * (b_out ** 4.0) / (b_in ** 2.0))
        idx = _s2_gather_indices(b_in, b_out)
    else:  # 'SO3'
        scaling = 1.0 / math.sqrt(t * c_in * (b_out ** 3.0) / (b_in ** 3.0))
        idx = _so3_gather_indices(b_in, b_out)
    k = t * c_in
    kp = _round_up(k, LANES)                               # lane-dense contraction dim
    w_mat = jnp.transpose(w, (2, 0, 1)).reshape(k, c_out) * scaling
    w_mat = jnp.pad(w_mat, ((0, kp - k), (0, cp - c_out))).astype(jnp.bfloat16)
    # Conv bias dropped: training-mode BatchNorm removes any per-channel constant
    # exactly (and the reference init is zero anyway) -> identical output.
    return w_mat, np.asarray(idx, np.int32), kp


def _gather_im2col(x_cl, idx, kp):
    """x_cl: (N, S_in, C) channel-last bf16; idx: static (S_out, T) -> (N*S_out, Kp) bf16."""
    n, _, c = x_cl.shape
    s_out, t = idx.shape
    xg = x_cl[:, idx, :].reshape(n * s_out, t * c)
    if kp > t * c:
        xg = jnp.pad(xg, ((0, 0), (0, kp - t * c)))
    return xg


# ----------------------------------------------------------------------------
# The Block
# ----------------------------------------------------------------------------
class Block:
    """road1: conv1 -> BN -> SELU -> SO3 conv -> BN -> SELU
       road2: conv1 -> BN -> SELU
       road3: BN -> SELU of (road1 + road2)"""

    def __init__(self, in_features, out_features, b_in, b_out, conv1="S2", *, key):
        ks = jax.random.split(key, 3)
        self.in_features = in_features
        self.out_features = out_features
        self.b_in, self.b_out = b_in, b_out
        self.cp = _round_up(out_features, LANES)
        cp = self.cp
        self.w_r1a, self.idx1, self.kp1 = _init_conv(ks[0], in_features, out_features,
                                                     b_in, b_out, conv1, cp)
        self.w_r1b, self.idx2, self.kp2 = _init_conv(ks[1], out_features, out_features,
                                                     b_out, b_out, "SO3", cp)
        self.w_r2, _, _ = _init_conv(ks[2], in_features, out_features,
                                     b_in, b_out, conv1, cp)

        def pad_gb(g, b):
            gp = jnp.zeros((1, cp), jnp.float32).at[0, :out_features].set(g)
            bp = jnp.zeros((1, cp), jnp.float32).at[0, :out_features].set(b)
            return gp, bp

        ones = jnp.ones((out_features,), jnp.float32)
        zeros = jnp.zeros((out_features,), jnp.float32)
        self.bn_r1a = pad_gb(ones, zeros)
        self.bn_r1b = pad_gb(ones, zeros)
        self.bn_r2 = pad_gb(ones, zeros)
        self.bn_r3 = pad_gb(ones, zeros)

    def __call__(self, x):
        n = x.shape[0]
        c = self.out_features
        n2 = 2 * self.b_out
        s_out = n2 ** 3
        m = n * s_out

        # channel-last bf16 input (single small transpose)
        x_cl = jnp.transpose(x.reshape(n, self.in_features, -1), (0, 2, 1)).astype(jnp.bfloat16)

        # ---- road1a + road2: shared gathered input, fused conv + BN-stats kernel ----
        xg1 = _gather_im2col(x_cl, self.idx1, self.kp1)
        (ya, yb), ((sa, qa), (sb, qb)) = conv_stats_pallas(xg1, [self.w_r1a, self.w_r2])
        sc_a, sh_a = _bn_affine(sa, qa, m, *self.bn_r1a)
        sc_b, sh_b = _bn_affine(sb, qb, m, *self.bn_r2)
        # Only road1a needs its BN+SELU materialized (it feeds the next conv);
        # road2's BN+SELU is fused into the residual kernel below.
        (a1,) = bn_selu_pallas([ya], [sc_a], [sh_a], out_dtype=jnp.bfloat16)

        # ---- road1b: SO3 conv on a1 (stays channel-last) ----
        a1_cl = a1[:, :c].reshape(n, s_out, c)
        xg2 = _gather_im2col(a1_cl, self.idx2, self.kp2)
        (y1b,), ((s1b, q1b),) = conv_stats_pallas(xg2, [self.w_r1b])
        sc_1b, sh_1b = _bn_affine(s1b, q1b, m, *self.bn_r1b)

        # ---- fused: BN+SELU(road1b) + BN+SELU(road2) + residual add + road3 BN stats ----
        s, s3, q3 = bn_selu_add_stats_pallas(y1b, yb, sc_1b, sh_1b, sc_b, sh_b)
        sc_3, sh_3 = _bn_affine(s3, q3, m, *self.bn_r3)

        # ---- road3 BN + SELU (f32 output) ----
        (out,) = bn_selu_pallas([s], [sc_3], [sh_3], out_dtype=jnp.float32)

        out = out[:, :c].reshape(n, n2, n2, n2, c)
        return jnp.transpose(out, (0, 4, 1, 2, 3))


# ----------------------------------------------------------------------------
if __name__ == "__main__":
    key = jax.random.PRNGKey(0)
    k_x1, k_x2, k_p1, k_p2, k_t1, k_t2, k_t3 = jax.random.split(key, 7)

    # Standalone check of the K-tiled conv+stats path (not exercised by the tiny
    # Block shapes below) against a pure-JAX reference.
    M_T, K_T, CP_T = 256, 256, 128
    xg_t = jax.random.normal(k_t1, (M_T, K_T), jnp.float32).astype(jnp.bfloat16)
    w_t1 = jax.random.normal(k_t2, (K_T, CP_T), jnp.float32).astype(jnp.bfloat16)
    w_t2 = jax.random.normal(k_t3, (K_T, CP_T), jnp.float32).astype(jnp.bfloat16)
    (y_t1, y_t2), ((s_t1, q_t1), (s_t2, q_t2)) = conv_stats_pallas(
        xg_t, [w_t1, w_t2], force_tk=128)
    jax.block_until_ready(y_t1)
    for y_p, s_p, q_p, w_p in ((y_t1, s_t1, q_t1, w_t1), (y_t2, s_t2, q_t2, w_t2)):
        y_ref = jnp.dot(xg_t.astype(jnp.float32), w_p.astype(jnp.float32))
        assert bool(jnp.allclose(y_p.astype(jnp.float32), y_ref, rtol=2e-2, atol=0.5))
        assert bool(jnp.allclose(jnp.sum(s_p, axis=(0, 1)), jnp.sum(y_ref, axis=0),
                                 rtol=1e-2, atol=1.0))
        assert bool(jnp.allclose(jnp.sum(q_p, axis=(0, 1)),
                                 jnp.sum(y_ref * y_ref, axis=0), rtol=1e-2, atol=1.0))

    N, C_IN, C_OUT, B_IN, B_OUT = 2, 3, 4, 4, 4

    # SO3-input variant: (N, in_features, 2b, 2b, 2b)
    blk_so3 = Block(C_IN, C_OUT, B_IN, B_OUT, conv1="SO3", key=k_p1)
    x5 = jax.random.normal(k_x1, (N, C_IN, 2 * B_IN, 2 * B_IN, 2 * B_IN), jnp.float32)
    y5 = blk_so3(x5)
    jax.block_until_ready(y5)
    assert y5.shape == (N, C_OUT, 2 * B_OUT, 2 * B_OUT, 2 * B_OUT)
    assert bool(jnp.all(jnp.isfinite(y5)))

    # S2-input variant (default conv1='S2'): (N, in_features, 2b, 2b)
    blk_s2 = Block(C_IN, C_OUT, B_IN, B_OUT, conv1="S2", key=k_p2)
    x4 = jax.random.normal(k_x2, (N, C_IN, 2 * B_IN, 2 * B_IN), jnp.float32)
    y4 = blk_s2(x4)
    jax.block_until_ready(y4)
    assert y4.shape == (N, C_OUT, 2 * B_OUT, 2 * B_OUT, 2 * B_OUT)
    assert bool(jnp.all(jnp.isfinite(y4)))

    print("KERNEL_OK")
</pallas_src>

<mosaic_0001>
module attributes {stable_mosaic.version = 11 : i64} {
  func.func @kernel(%arg0: i32, %arg1: i32, %arg2: memref<128x128xbf16, #tpu.memory_space<vmem>>, %arg3: memref<128x128xbf16, #tpu.memory_space<vmem>>, %arg4: memref<128x128xbf16, #tpu.memory_space<vmem>>, %arg5: memref<128x128xbf16, #tpu.memory_space<vmem>>, %arg6: memref<128x128xbf16, #tpu.memory_space<vmem>>, %arg7: memref<1x1x128xf32, #tpu.memory_space<vmem>>, %arg8: memref<1x1x128xf32, #tpu.memory_space<vmem>>, %arg9: memref<1x1x128xf32, #tpu.memory_space<vmem>>, %arg10: memref<1x1x128xf32, #tpu.memory_space<vmem>>, %arg11: memref<128x128xf32, #tpu.memory_space<vmem>>, %arg12: memref<128x128xf32, #tpu.memory_space<vmem>>) attributes {dimension_semantics = [#tpu.dimension_semantics<parallel>, #tpu.dimension_semantics<arbitrary>], iteration_bounds = array<i64: 2, 2>, scalar_prefetch = 0 : i64, scratch_operands = 2 : i64, tpu.core_type = #tpu.core_type<tc>, window_params = [{transform_indices = @transform_0, window_bounds = array<i64: 128, 128>}, {transform_indices = @transform_1, window_bounds = array<i64: 128, 128>}, {transform_indices = @transform_2, window_bounds = array<i64: 128, 128>}, {transform_indices = @transform_3, window_bounds = array<i64: 128, 128>}, {transform_indices = @transform_4, window_bounds = array<i64: 128, 128>}, {transform_indices = @transform_5, window_bounds = array<i64: 1, 1, 128>}, {transform_indices = @transform_6, window_bounds = array<i64: 1, 1, 128>}, {transform_indices = @transform_7, window_bounds = array<i64: 1, 1, 128>}, {transform_indices = @transform_8, window_bounds = array<i64: 1, 1, 128>}]} {
    %c0 = arith.constant 0 : index
    %c0_0 = arith.constant 0 : index
    %0 = vector.load %arg2[%c0, %c0_0] : memref<128x128xbf16, #tpu.memory_space<vmem>>, vector<128x128xbf16>
    %c0_i32 = arith.constant 0 : i32
    %1 = arith.cmpi eq, %arg1, %c0_i32 : i32
    %2 = arith.extui %1 : i1 to i32
    %c0_i32_1 = arith.constant 0 : i32
    %3 = arith.cmpi ne, %2, %c0_i32_1 : i32
    scf.if %3 {
      %cst_16 = arith.constant 0.000000e+00 : f32
      %17 = vector.broadcast %cst_16 : f32 to vector<128x128xf32>
      %c0_17 = arith.constant 0 : index
      %c0_18 = arith.constant 0 : index
      %18 = vector.load %arg11[%c0_17, %c0_18] : memref<128x128xf32, #tpu.memory_space<vmem>>, vector<128x128xf32>
      tpu.vector_store %arg11[%c0_17, %c0_18], %17 {strides = array<i32>} : memref<128x128xf32, #tpu.memory_space<vmem>>, vector<128x128xf32>,
      %cst_19 = arith.constant 0.000000e+00 : f32
      %19 = vector.broadcast %cst_19 : f32 to vector<128x128xf32>
      %c0_20 = arith.constant 0 : index
      %c0_21 = arith.constant 0 : index
      %20 = vector.load %arg12[%c0_20, %c0_21] : memref<128x128xf32, #tpu.memory_space<vmem>>, vector<128x128xf32>
      tpu.vector_store %arg12[%c0_20, %c0_21], %19 {strides = array<i32>} : memref<128x128xf32, #tpu.memory_space<vmem>>, vector<128x128xf32>,
    } else {
    }
    %c0_2 = arith.constant 0 : index
    %c0_3 = arith.constant 0 : index
    %4 = vector.load %arg11[%c0_2, %c0_3] : memref<128x128xf32, #tpu.memory_space<vmem>>, vector<128x128xf32>
    %c0_4 = arith.constant 0 : index
    %c0_5 = arith.constant 0 : index
    %5 = vector.load %arg3[%c0_4, %c0_5] : memref<128x128xbf16, #tpu.memory_space<vmem>>, vector<128x128xbf16>
    %cst = arith.constant dense<0.000000e+00> : vector<128x128xf32>
    %6 = tpu.matmul %0, %5, %cst {dimension_numbers = #tpu.dot_dimension_numbers<[1], [0], [0], [1], [0, 0, 1, 1], [], []>} : vector<128x128xbf16>, vector<128x128xbf16>, vector<128x128xf32> -> vector<128x128xf32>
    %7 = arith.addf %4, %6 : vector<128x128xf32>
    %c0_6 = arith.constant 0 : index
    %c0_7 = arith.constant 0 : index
    %8 = vector.load %arg11[%c0_6, %c0_7] : memref<128x128xf32, #tpu.memory_space<vmem>>, vector<128x128xf32>
    tpu.vector_store %arg11[%c0_6, %c0_7], %7 {strides = array<i32>} : memref<128x128xf32, #tpu.memory_space<vmem>>, vector<128x128xf32>,
    %c0_8 = arith.constant 0 : index
    %c0_9 = arith.constant 0 : index
    %9 = vector.load %arg12[%c0_8, %c0_9] : memref<128x128xf32, #tpu.memory_space<vmem>>, vector<128x128xf32>
    %c0_10 = arith.constant 0 : index
    %c0_11 = arith.constant 0 : index
    %10 = vector.load %arg4[%c0_10, %c0_11] : memref<128x128xbf16, #tpu.memory_space<vmem>>, vector<128x128xbf16>
    %cst_12 = arith.constant dense<0.000000e+00> : vector<128x128xf32>
    %11 = tpu.matmul %0, %10, %cst_12 {dimension_numbers = #tpu.dot_dimension_numbers<[1], [0], [0], [1], [0, 0, 1, 1], [], []>} : vector<128x128xbf16>, vector<128x128xbf16>, vector<128x128xf32> -> vector<128x128xf32>
    %12 = arith.addf %9, %11 : vector<128x128xf32>
    %c0_13 = arith.constant 0 : index
    %c0_14 = arith.constant 0 : index
    %13 = vector.load %arg12[%c0_13, %c0_14] : memref<128x128xf32, #tpu.memory_space<vmem>>, vector<128x128xf32>
    tpu.vector_store %arg12[%c0_13, %c0_14], %12 {strides = array<i32>} : memref<128x128xf32, #tpu.memory_space<vmem>>, vector<128x128xf32>,
    %c1_i32 = arith.constant 1 : i32
    %14 = arith.cmpi eq, %arg1, %c1_i32 : i32
    %15 = arith.extui %14 : i1 to i32
    %c0_i32_15 = arith.constant 0 : i32
    %16 = arith.cmpi ne, %15, %c0_i32_15 : i32
    scf.if %16 {
      %c0_16 = arith.constant 0 : index
      %c0_17 = arith.constant 0 : index
      %17 = vector.load %arg11[%c0_16, %c0_17] : memref<128x128xf32, #tpu.memory_space<vmem>>, vector<128x128xf32>
      %18 = arith.truncf %17 : vector<128x128xf32> to vector<128x128xbf16>
      %c0_18 = arith.constant 0 : index
      %c0_19 = arith.constant 0 : index
      %19 = vector.load %arg5[%c0_18, %c0_19] : memref<128x128xbf16, #tpu.memory_space<vmem>>, vector<128x128xbf16>
      tpu.vector_store %arg5[%c0_18, %c0_19], %18 {strides = array<i32>} : memref<128x128xbf16, #tpu.memory_space<vmem>>, vector<128x128xbf16>,
      %cst_20 = arith.constant dense<0.000000e+00> : vector<128xf32>
      %20 = vector.multi_reduction <add>, %17, %cst_20 [0] : vector<128x128xf32> to vector<128xf32>
      %21 = vector.shape_cast %20 : vector<128xf32> to vector<1x128xf32>
      %22 = vector.shape_cast %21 : vector<1x128xf32> to vector<1x1x128xf32>
      %c0_21 = arith.constant 0 : index
      %c0_22 = arith.constant 0 : index
      %c0_23 = arith.constant 0 : index
      %23 = vector.load %arg7[%c0_21, %c0_22, %c0_23] : memref<1x1x128xf32, #tpu.memory_space<vmem>>, vector<1x1x128xf32>
      tpu.vector_store %arg7[%c0_21, %c0_22, %c0_23], %22 {strides = array<i32>} : memref<1x1x128xf32, #tpu.memory_space<vmem>>, vector<1x1x128xf32>,
      %24 = arith.mulf %17, %17 : vector<128x128xf32>
      %cst_24 = arith.constant dense<0.000000e+00> : vector<128xf32>
      %25 = vector.multi_reduction <add>, %24, %cst_24 [0] : vector<128x128xf32> to vector<128xf32>
      %26 = vector.shape_cast %25 : vector<128xf32> to vector<1x128xf32>
      %27 = vector.shape_cast %26 : vector<1x128xf32> to vector<1x1x128xf32>
      %c0_25 = arith.constant 0 : index
      %c0_26 = arith.constant 0 : index
      %c0_27 = arith.constant 0 : index
      %28 = vector.load %arg8[%c0_25, %c0_26, %c0_27] : memref<1x1x128xf32, #tpu.memory_space<vmem>>, vector<1x1x128xf32>
      tpu.vector_store %arg8[%c0_25, %c0_26, %c0_27], %27 {strides = array<i32>} : memref<1x1x128xf32, #tpu.memory_space<vmem>>, vector<1x1x128xf32>,
      %c0_28 = arith.constant 0 : index
      %c0_29 = arith.constant 0 : index
      %29 = vector.load %arg12[%c0_28, %c0_29] : memref<128x128xf32, #tpu.memory_space<vmem>>, vector<128x128xf32>
      %30 = arith.truncf %29 : vector<128x128xf32> to vector<128x128xbf16>
      %c0_30 = arith.constant 0 : index
      %c0_31 = arith.constant 0 : index
      %31 = vector.load %arg6[%c0_30, %c0_31] : memref<128x128xbf16, #tpu.memory_space<vmem>>, vector<128x128xbf16>
      tpu.vector_store %arg6[%c0_30, %c0_31], %30 {strides = array<i32>} : memref<128x128xbf16, #tpu.memory_space<vmem>>, vector<128x128xbf16>,
      %cst_32 = arith.constant dense<0.000000e+00> : vector<128xf32>
      %32 = vector.multi_reduction <add>, %29, %cst_32 [0] : vector<128x128xf32> to vector<128xf32>
      %33 = vector.shape_cast %32 : vector<128xf32> to vector<1x128xf32>
      %34 = vector.shape_cast %33 : vector<1x128xf32> to vector<1x1x128xf32>
      %c0_33 = arith.constant 0 : index
      %c0_34 = arith.constant 0 : index
      %c0_35 = arith.constant 0 : index
      %35 = vector.load %arg9[%c0_33, %c0_34, %c0_35] : memref<1x1x128xf32, #tpu.memory_space<vmem>>, vector<1x1x128xf32>
      tpu.vector_store %arg9[%c0_33, %c0_34, %c0_35], %34 {strides = array<i32>} : memref<1x1x128xf32, #tpu.memory_space<vmem>>, vector<1x1x128xf32>,
      %36 = arith.mulf %29, %29 : vector<128x128xf32>
      %cst_36 = arith.constant dense<0.000000e+00> : vector<128xf32>
      %37 = vector.multi_reduction <add>, %36, %cst_36 [0] : vector<128x128xf32> to vector<128xf32>
      %38 = vector.shape_cast %37 : vector<128xf32> to vector<1x128xf32>
      %39 = vector.shape_cast %38 : vector<1x128xf32> to vector<1x1x128xf32>
      %c0_37 = arith.constant 0 : index
      %c0_38 = arith.constant 0 : index
      %c0_39 = arith.constant 0 : index
      %40 = vector.load %arg10[%c0_37, %c0_38, %c0_39] : memref<1x1x128xf32, #tpu.memory_space<vmem>>, vector<1x1x128xf32>
      tpu.vector_store %arg10[%c0_37, %c0_38, %c0_39], %39 {strides = array<i32>} : memref<1x1x128xf32, #tpu.memory_space<vmem>>, vector<1x1x128xf32>,
    } else {
    }
    return
  }
  func.func @transform_0(%arg0: i32, %arg1: i32) -> (i32, i32) {
    %c0_i32 = arith.constant 0 : i32
    return %arg0, %arg1 : i32, i32
  }
  func.func @transform_1(%arg0: i32, %arg1: i32) -> (i32, i32) {
    %c0_i32 = arith.constant 0 : i32
    %c0_i32_0 = arith.constant 0 : i32
    return %arg1, %c0_i32 : i32, i32
  }
  func.func @transform_2(%arg0: i32, %arg1: i32) -> (i32, i32) {
    %c0_i32 = arith.constant 0 : i32
    %c0_i32_0 = arith.constant 0 : i32
    return %arg1, %c0_i32 : i32, i32
  }
  func.func @transform_3(%arg0: i32, %arg1: i32) -> (i32, i32) {
    %c0_i32 = arith.constant 0 : i32
    %c0_i32_0 = arith.constant 0 : i32
    return %arg0, %c0_i32 : i32, i32
  }
  func.func @transform_4(%arg0: i32, %arg1: i32) -> (i32, i32) {
    %c0_i32 = arith.constant 0 : i32
    %c0_i32_0 = arith.constant 0 : i32
    return %arg0, %c0_i32 : i32, i32
  }
  func.func @transform_5(%arg0: i32, %arg1: i32) -> (i32, i32, i32) {
    %c0_i32 = arith.constant 0 : i32
    %c0_i32_0 = arith.constant 0 : i32
    %c0_i32_1 = arith.constant 0 : i32
    return %arg0, %c0_i32, %c0_i32_0 : i32, i32, i32
  }
  func.func @transform_6(%arg0: i32, %arg1: i32) -> (i32, i32, i32) {
    %c0_i32 = arith.constant 0 : i32
    %c0_i32_0 = arith.constant 0 : i32
    %c0_i32_1 = arith.constant 0 : i32
    return %arg0, %c0_i32, %c0_i32_0 : i32, i32, i32
  }
  func.func @transform_7(%arg0: i32, %arg1: i32) -> (i32, i32, i32) {
    %c0_i32 = arith.constant 0 : i32
    %c0_i32_0 = arith.constant 0 : i32
    %c0_i32_1 = arith.constant 0 : i32
    return %arg0, %c0_i32, %c0_i32_0 : i32, i32, i32
  }
  func.func @transform_8(%arg0: i32, %arg1: i32) -> (i32, i32, i32) {
    %c0_i32 = arith.constant 0 : i32
    %c0_i32_0 = arith.constant 0 : i32
    %c0_i32_1 = arith.constant 0 : i32
    return %arg0, %c0_i32, %c0_i32_0 : i32, i32, i32
  }
}

</mosaic_0001>

<llo_original>
// kernel: tpu_custom_call.1
$region0: #{tpu_custom_call.1}
  #allocation0 [shape = 'u32[]', space=smem, size = 0x4, offset = 0x4, fixed_abs, tag = 'smem constant byte address 0x4 - core index']
  #allocation1 [shape = 'u32[144,128]{1,0:T(1,128)}', space=vmem, size = 0x12000, scoped, tag = 'internal scratch']
  #allocation2 [shape = 'f32[128,128]{1,0:T(8,128)}', space=vmem, size = 0x10000, scoped, tag = 'scratch operand']
  #allocation3 [shape = 'f32[128,128]{1,0:T(8,128)}', space=vmem, size = 0x10000, scoped, tag = 'scratch operand']
  %s0 = inlined_call_operand.hbm [shape: bf16[256,256], index: 0, kind: input, shape index: {}]
  %s1 = inlined_call_operand.hbm [shape: bf16[256,128], index: 1, kind: input, shape index: {}]
  %s2 = inlined_call_operand.hbm [shape: bf16[256,128], index: 2, kind: input, shape index: {}]
  %s3 = inlined_call_operand.hbm [shape: bf16[256,128], index: 3, kind: output, shape index: {0}]
  %s4 = inlined_call_operand.hbm [shape: bf16[256,128], index: 4, kind: output, shape index: {1}]
  %s5 = inlined_call_operand.hbm [shape: f32[2,1,128], index: 5, kind: output, shape index: {2}]
  %s6 = inlined_call_operand.hbm [shape: f32[2,1,128], index: 6, kind: output, shape index: {3}]
  %s7 = inlined_call_operand.hbm [shape: f32[2,1,128], index: 7, kind: output, shape index: {4}]
  %s8 = inlined_call_operand.hbm [shape: f32[2,1,128], index: 8, kind: output, shape index: {5}]
  %9 = xla_tuple %s3, %s4, %s5, %s6, %s7, %s8
  %s10 = sld [smem:[#allocation0]]
  $region105: #{tpu_custom_call.1} parent=0
    _
  %s12 = ssub.s32 1, %s10
  %s13 = scalar_select 0, %s12, %s10
  $region1: #{tpu_custom_call.1} parent=0
    #allocation4 [shape = 'u8[65536]{0}', space=vmem, size = 0x10000, scoped, tag = 'input window, operand 0']
    #allocation5 [shape = 's32[2]{0}', space=sflag, size = 0x8, scoped, tag = 'scoped memory for tpu_custom_call.1']
    #allocation6 [shape = 's32[2]{0}', space=sflag, size = 0x8, scoped, tag = 'scoped memory for tpu_custom_call.1']
    #allocation7 [shape = 'u8[65536]{0}', space=vmem, size = 0x10000, scoped, tag = 'input window, operand 1']
    #allocation8 [shape = 's32[2]{0}', space=sflag, size = 0x8, scoped, tag = 'scoped memory for tpu_custom_call.1']
    #allocation9 [shape = 'u8[65536]{0}', space=vmem, size = 0x10000, scoped, tag = 'input window, operand 2']
    #allocation10 [shape = 'u8[65536]{0}', space=vmem, size = 0x10000, scoped, tag = 'output window, operand 0']
    #allocation11 [shape = 'u8[65536]{0}', space=vmem, size = 0x10000, scoped, tag = 'output window, operand 1']
    #allocation12 [shape = 's32[2]{0}', space=sflag, size = 0x8, scoped, tag = 'scoped memory for tpu_custom_call.1']
    #allocation13 [shape = 'u8[1024]{0}', space=vmem, size = 0x400, scoped, tag = 'output window, operand 2']
    #allocation14 [shape = 'u8[1024]{0}', space=vmem, size = 0x400, scoped, tag = 'output window, operand 3']
    #allocation15 [shape = 's32[2]{0}', space=sflag, size = 0x8, scoped, tag = 'scoped memory for tpu_custom_call.1']
    #allocation16 [shape = 'u8[1024]{0}', space=vmem, size = 0x400, scoped, tag = 'output window, operand 4']
    #allocation17 [shape = 'u8[1024]{0}', space=vmem, size = 0x400, scoped, tag = 'output window, operand 5']
    #allocation18 [shape = 's32[2]{0}', space=sflag, size = 0x8, scoped, tag = 'scoped memory for tpu_custom_call.1']
    %14 = vsyncpa [#allocation5], 0
    %s15 = scalar_lea.sflag [#allocation5], 1
    %16 = vsyncpa %s15, 0
    %17 = vsyncpa [#allocation8], 0
    %s18 = scalar_lea.sflag [#allocation8], 1
    %19 = vsyncpa %s18, 0
    %20 = vsyncpa [#allocation6], 0
    %s21 = scalar_lea.sflag [#allocation6], 1
    %22 = vsyncpa %s21, 0
    %23 = vsyncpa [#allocation12], 0
    %s24 = scalar_lea.sflag [#allocation12], 1
    %25 = vsyncpa %s24, 0
    %26 = vsyncpa [#allocation15], 0
    %s27 = scalar_lea.sflag [#allocation15], 1
    %28 = vsyncpa %s27, 0
    %29 = vsyncpa [#allocation18], 0
    %s30 = scalar_lea.sflag [#allocation18], 1
    %31 = vsyncpa %s30, 0
    loop: start=0, step=1, limit=6
    $region2: #{tpu_custom_call.1} parent=1 // loop_pre_header
      _
    $region3: #{tpu_custom_call.1} parent=1 // loop_header
      %s33 = sphi 0, %s37
      %p34 = scmp.ge.s32.totalorder %s33, 6
      %s40 = sphi 0, %s52
      %s41 = sphi 0, %s48
      %s42 = sphi 0, %s40
      %s43 = sphi 0, %s41
      %s44 = sphi 0, %s42
      %s45 = sphi 0, %s43
      %s57 = sphi 0, %s59
      %s60 = sphi 0, %s57
      %s61 = sphi 0, %s60
      %s77 = sphi 0, %s61
      %s83 = sphi 0, %s85
      %s86 = sphi 0, %s83
      %s87 = sphi 0, %s86
      %s103 = sphi 0, %s87
      %s109 = sphi 0, %s111
      %s112 = sphi 0, %s109
      %s113 = sphi 0, %s112
      %s129 = sphi 0, %s113
      %s135 = sphi 0, %s137
      %s138 = sphi 0, %s135
      %s139 = sphi 0, %s138
      %s155 = sphi 0, %s139
      %s161 = sphi 0, %s163
      %s164 = sphi 0, %s161
      %s165 = sphi 0, %s164
      %s181 = sphi 0, %s165
      %s187 = sphi 0, %s189
      %s190 = sphi 0, %s187
      %s191 = sphi 0, %s190
      %s207 = sphi 0, %s191
      %s213 = sphi 0, %s215
      %s216 = sphi 0, %s213
      %s217 = sphi 0, %s216
      %s233 = sphi 0, %s217
      %s239 = sphi 0, %s241
      %s242 = sphi 0, %s239
      %s243 = sphi 0, %s242
      %s259 = sphi 0, %s243
      %s265 = sphi 0, %s267
      %s268 = sphi 0, %s265
      %s269 = sphi 0, %s268
      %s285 = sphi 0, %s269
    $region4: #{tpu_custom_call.1} parent=1 // loop_header_branch
      %36 = sbr.rel (%p34) target = $region8
    $region5: #{tpu_custom_call.1} parent=1 // loop_body
      %s38 = ssub.s32 %s33, 1
      %s39 = ssub.s32 %s33, 2
      %s46 = sadd.s32 1, %s41
      %p47 = scmp.ge.s32.totalorder %s46, 2
      %s48 = scalar_select %p47, 0, %s46
      %s49 = sadd.s32 1, %s40
      %s50 = scalar_select %p47, %s49, %s40
      %p51 = scmp.ge.s32.totalorder %s50, 2
      %s52 = scalar_select %p51, 0, %s50
      %s53 = ssub.s32 %s40, %s52
      %s54 = ssub.s32 %s41, %s48
      %s55 = sor.u32 %s53, %s54
      %p56 = scmp.eq.s32.totalorder %s55, 0
      %s58 = sadd.s32 %s57, 1
      %s59 = scalar_select %p56, %s57, %s58
      %p62 = pneg %p56
      %p63 = scmp.eq.s32.totalorder %s33, 3
      %p64 = por %p62, %p63
      %p65 = scmp.ne.s32.totalorder %s57, %s60
      %p66 = scmp.eq.s32.totalorder %s33, 0
      %p67 = por %p65, %p66
      %p68 = scmp.ne.s32.totalorder %s57, %s60
      %p69 = scmp.eq.s32.totalorder %s38, 3
      %p70 = por %p68, %p69
      %p71 = scmp.ne.s32.totalorder %s60, %s61
      %p72 = scmp.eq.s32.totalorder %s38, 0
      %p73 = por %p71, %p72
      %p74 = scmp.ne.s32.totalorder %s60, %s61
      %p75 = scmp.eq.s32.totalorder %s39, 3
      %p76 = por %p74, %p75
      %p78 = scmp.ne.s32.totalorder %s61, %s77
      %p79 = scmp.eq.s32.totalorder %s39, 0
      %p80 = por %p78, %p79
      %s81 = ssub.s32 %s41, %s48
      %p82 = scmp.eq.s32.totalorder %s81, 0
      %s84 = sadd.s32 %s83, 1
      %s85 = scalar_select %p82, %s83, %s84
      %p88 = pneg %p82
      %p89 = scmp.eq.s32.totalorder %s33, 3
      %p90 = por %p88, %p89
      %p91 = scmp.ne.s32.totalorder %s83, %s86
      %p92 = scmp.eq.s32.totalorder %s33, 0
      %p93 = por %p91, %p92
      %p94 = scmp.ne.s32.totalorder %s83, %s86
      %p95 = scmp.eq.s32.totalorder %s38, 3
      %p96 = por %p94, %p95
      %p97 = scmp.ne.s32.totalorder %s86, %s87
      %p98 = scmp.eq.s32.totalorder %s38, 0
      %p99 = por %p97, %p98
      %p100 = scmp.ne.s32.totalorder %s86, %s87
      %p101 = scmp.eq.s32.totalorder %s39, 3
      %p102 = por %p100, %p101
      %p104 = scmp.ne.s32.totalorder %s87, %s103
      %p105 = scmp.eq.s32.totalorder %s39, 0
      %p106 = por %p104, %p105
      %s107 = ssub.s32 %s41, %s48
      %p108 = scmp.eq.s32.totalorder %s107, 0
      %s110 = sadd.s32 %s109, 1
      %s111 = scalar_select %p108, %s109, %s110
      %p114 = pneg %p108
      %p115 = scmp.eq.s32.totalorder %s33, 3
      %p116 = por %p114, %p115
      %p117 = scmp.ne.s32.totalorder %s109, %s112
      %p118 = scmp.eq.s32.totalorder %s33, 0
      %p119 = por %p117, %p118
      %p120 = scmp.ne.s32.totalorder %s109, %s112
      %p121 = scmp.eq.s32.totalorder %s38, 3
      %p122 = por %p120, %p121
      %p123 = scmp.ne.s32.totalorder %s112, %s113
      %p124 = scmp.eq.s32.totalorder %s38, 0
      %p125 = por %p123, %p124
      %p126 = scmp.ne.s32.totalorder %s112, %s113
      %p127 = scmp.eq.s32.totalorder %s39, 3
      %p128 = por %p126, %p127
      %p130 = scmp.ne.s32.totalorder %s113, %s129
      %p131 = scmp.eq.s32.totalorder %s39, 0
      %p132 = por %p130, %p131
      %s133 = ssub.s32 %s40, %s52
      %p134 = scmp.eq.s32.totalorder %s133, 0
      %s136 = sadd.s32 %s135, 1
      %s137 = scalar_select %p134, %s135, %s136
      %p140 = pneg %p134
      %p141 = scmp.eq.s32.totalorder %s33, 3
      %p142 = por %p140, %p141
      %p143 = scmp.ne.s32.totalorder %s135, %s138
      %p144 = scmp.eq.s32.totalorder %s33, 0
      %p145 = por %p143, %p144
      %p146 = scmp.ne.s32.totalorder %s135, %s138
      %p147 = scmp.eq.s32.totalorder %s38, 3
      %p148 = por %p146, %p147
      %p149 = scmp.ne.s32.totalorder %s138, %s139
      %p150 = scmp.eq.s32.totalorder %s38, 0
      %p151 = por %p149, %p150
      %p152 = scmp.ne.s32.totalorder %s138, %s139
      %p153 = scmp.eq.s32.totalorder %s39, 3
      %p154 = por %p152, %p153
      %p156 = scmp.ne.s32.totalorder %s139, %s155
      %p157 = scmp.eq.s32.totalorder %s39, 0
      %p158 = por %p156, %p157
      %s159 = ssub.s32 %s40, %s52
      %p160 = scmp.eq.s32.totalorder %s159, 0
      %s162 = sadd.s32 %s161, 1
      %s163 = scalar_select %p160, %s161, %s162
      %p166 = pneg %p160
      %p167 = scmp.eq.s32.totalorder %s33, 3
      %p168 = por %p166, %p167
      %p169 = scmp.ne.s32.totalorder %s161, %s164
      %p170 = scmp.eq.s32.totalorder %s33, 0
      %p171 = por %p169, %p170
      %p172 = scmp.ne.s32.totalorder %s161, %s164
      %p173 = scmp.eq.s32.totalorder %s38, 3
      %p174 = por %p172, %p173
      %p175 = scmp.ne.s32.totalorder %s164, %s165
      %p176 = scmp.eq.s32.totalorder %s38, 0
      %p177 = por %p175, %p176
      %p178 = scmp.ne.s32.totalorder %s164, %s165
      %p179 = scmp.eq.s32.totalorder %s39, 3
      %p180 = por %p178, %p179
      %p182 = scmp.ne.s32.totalorder %s165, %s181
      %p183 = scmp.eq.s32.totalorder %s39, 0
      %p184 = por %p182, %p183
      %s185 = ssub.s32 %s40, %s52
      %p186 = scmp.eq.s32.totalorder %s185, 0
      %s188 = sadd.s32 %s187, 1
      %s189 = scalar_select %p186, %s187, %s188
      %p192 = pneg %p186
      %p193 = scmp.eq.s32.totalorder %s33, 3
      %p194 = por %p192, %p193
      %p195 = scmp.ne.s32.totalorder %s187, %s190
      %p196 = scmp.eq.s32.totalorder %s33, 0
      %p197 = por %p195, %p196
      %p198 = scmp.ne.s32.totalorder %s187, %s190
      %p199 = scmp.eq.s32.totalorder %s38, 3
      %p200 = por %p198, %p199
      %p201 = scmp.ne.s32.totalorder %s190, %s191
      %p202 = scmp.eq.s32.totalorder %s38, 0
      %p203 = por %p201, %p202
      %p204 = scmp.ne.s32.totalorder %s190, %s191
      %p205 = scmp.eq.s32.totalorder %s39, 3
      %p206 = por %p204, %p205
      %p208 = scmp.ne.s32.totalorder %s191, %s207
      %p209 = scmp.eq.s32.totalorder %s39, 0
      %p210 = por %p208, %p209
      %s211 = ssub.s32 %s40, %s52
      %p212 = scmp.eq.s32.totalorder %s211, 0
      %s214 = sadd.s32 %s213, 1
      %s215 = scalar_select %p212, %s213, %s214
      %p218 = pneg %p212
      %p219 = scmp.eq.s32.totalorder %s33, 3
      %p220 = por %p218, %p219
      %p221 = scmp.ne.s32.totalorder %s213, %s216
      %p222 = scmp.eq.s32.totalorder %s33, 0
      %p223 = por %p221, %p222
      %p224 = scmp.ne.s32.totalorder %s213, %s216
      %p225 = scmp.eq.s32.totalorder %s38, 3
      %p226 = por %p224, %p225
      %p227 = scmp.ne.s32.totalorder %s216, %s217
      %p228 = scmp.eq.s32.totalorder %s38, 0
      %p229 = por %p227, %p228
      %p230 = scmp.ne.s32.totalorder %s216, %s217
      %p231 = scmp.eq.s32.totalorder %s39, 3
      %p232 = por %p230, %p231
      %p234 = scmp.ne.s32.totalorder %s217, %s233
      %p235 = scmp.eq.s32.totalorder %s39, 0
      %p236 = por %p234, %p235
      %s237 = ssub.s32 %s40, %s52
      %p238 = scmp.eq.s32.totalorder %s237, 0
      %s240 = sadd.s32 %s239, 1
      %s241 = scalar_select %p238, %s239, %s240
      %p244 = pneg %p238
      %p245 = scmp.eq.s32.totalorder %s33, 3
      %p246 = por %p244, %p245
      %p247 = scmp.ne.s32.totalorder %s239, %s242
      %p248 = scmp.eq.s32.totalorder %s33, 0
      %p249 = por %p247, %p248
      %p250 = scmp.ne.s32.totalorder %s239, %s242
      %p251 = scmp.eq.s32.totalorder %s38, 3
      %p252 = por %p250, %p251
      %p253 = scmp.ne.s32.totalorder %s242, %s243
      %p254 = scmp.eq.s32.totalorder %s38, 0
      %p255 = por %p253, %p254
      %p256 = scmp.ne.s32.totalorder %s242, %s243
      %p257 = scmp.eq.s32.totalorder %s39, 3
      %p258 = por %p256, %p257
      %p260 = scmp.ne.s32.totalorder %s243, %s259
      %p261 = scmp.eq.s32.totalorder %s39, 0
      %p262 = por %p260, %p261
      %s263 = ssub.s32 %s40, %s52
      %p264 = scmp.eq.s32.totalorder %s263, 0
      %s266 = sadd.s32 %s265, 1
      %s267 = scalar_select %p264, %s265, %s266
      %p270 = pneg %p264
      %p271 = scmp.eq.s32.totalorder %s33, 3
      %p272 = por %p270, %p271
      %p273 = scmp.ne.s32.totalorder %s265, %s268
      %p274 = scmp.eq.s32.totalorder %s33, 0
      %p275 = por %p273, %p274
      %p276 = scmp.ne.s32.totalorder %s265, %s268
      %p277 = scmp.eq.s32.totalorder %s38, 3
      %p278 = por %p276, %p277
      %p279 = scmp.ne.s32.totalorder %s268, %s269
      %p280 = scmp.eq.s32.totalorder %s38, 0
      %p281 = por %p279, %p280
      %p282 = scmp.ne.s32.totalorder %s268, %s269
      %p283 = scmp.eq.s32.totalorder %s39, 3
      %p284 = por %p282, %p283
      %p286 = scmp.ne.s32.totalorder %s269, %s285
      %p287 = scmp.eq.s32.totalorder %s39, 0
      %p288 = por %p286, %p287
      %p289 = scmp.le.s32.totalorder 1, %s33
      %p290 = scmp.lt.s32.totalorder %s33, 5
      %p291 = pnand %p289, %p290
      %p292 = pneg %p291
      // Predicated region
      $region9: #{tpu_custom_call.1} parent=5 // pred_check
        _
      $region10: #{tpu_custom_call.1} parent=5 // pred_check_branch
        %294 = sbr.rel (%p291) target = $region12
      $region11: #{tpu_custom_call.1} parent=5 // pred_region
        %s295 = ssub.s32 %s33, 1
      $region12: #{tpu_custom_call.1} parent=5 // pred_fallthru
        _
      %p296 = scmp.lt.s32.totalorder %s33, 4
      // Predicated region
      $region13: #{tpu_custom_call.1} parent=5 // pred_check
        %p297 = pneg %p296
      $region14: #{tpu_custom_call.1} parent=5 // pred_check_branch
        %299 = sbr.rel (%p297) target = $region16
      $region15: #{tpu_custom_call.1} parent=5 // pred_region
        // Predicated region
        $region17: #{tpu_custom_call.1} parent=15 // pred_check
          %p300 = pneg %p67
        $region18: #{tpu_custom_call.1} parent=15 // pred_check_branch
          %302 = sbr.rel (%p300) target = $region20
        $region19: #{tpu_custom_call.1} parent=15 // pred_region
          %s303 = sand.u32 %s57, 1
          %s304 = scalar_lea.sflag [#allocation5], %s303
          %s305 = sand.u32 %s57, 1
          %s306 = smul.addr %s305, 64
          %s307 = scalar_lea.vmem [#allocation4], %s306
          %s308 = smul.u32 16, %s40
          %s310 = ssub.s32 1024, 1024
          %311 = vsyncadd %s304, %s310
          %s312 = smul.addr %s308, 2
          %s313 = sadd.s32 %s41, %s312
          %s314 = smul.addr %s313, 64
          %s315 = scalar_lea.hbm %s0, %s314
          %s316 = sshll.u32 %s307, 4
          %s317 = int_to_ptr.vmem [resolvable:$true] %s316
          %322 = dma.hbm_to_vmem [thread:$0]  %s315, 1024, %s317, %s304, 128, 64, 4
        $region20: #{tpu_custom_call.1} parent=15 // pred_fallthru
          _
        // Predicated region
        $region21: #{tpu_custom_call.1} parent=15 // pred_check
          %p323 = pneg %p93
        $region22: #{tpu_custom_call.1} parent=15 // pred_check_branch
          %325 = sbr.rel (%p323) target = $region24
        $region23: #{tpu_custom_call.1} parent=15 // pred_region
          %s326 = sand.u32 %s33, 1
          %s327 = scalar_lea.sflag [#allocation8], %s326
          %s328 = sand.u32 %s83, 1
          %s329 = smul.addr %s328, 64
          %s330 = scalar_lea.vmem [#allocation7], %s329
          %s331 = smul.u32 16, %s41
          %s333 = ssub.s32 1024, 1024
          %334 = vsyncadd %s327, %s333
          %s335 = smul.addr %s331, 64
          %s336 = scalar_lea.hbm %s1, %s335
          %s337 = sshll.u32 %s330, 4
          %s338 = int_to_ptr.vmem [resolvable:$true] %s337
          %343 = dma.hbm_to_vmem [thread:$0]  %s336, 1024, %s338, %s327, 64, 64, 4
        $region24: #{tpu_custom_call.1} parent=15 // pred_fallthru
          _
        // Predicated region
        $region25: #{tpu_custom_call.1} parent=15 // pred_check
          %p344 = pneg %p119
        $region26: #{tpu_custom_call.1} parent=15 // pred_check_branch
          %346 = sbr.rel (%p344) target = $region28
        $region27: #{tpu_custom_call.1} parent=15 // pred_region
          %s347 = sand.u32 %s33, 1
          %s348 = scalar_lea.sflag [#allocation8], %s347
          %s349 = sand.u32 %s109, 1
          %s350 = smul.addr %s349, 64
          %s351 = scalar_lea.vmem [#allocation9], %s350
          %s352 = smul.u32 16, %s41
          %s354 = ssub.s32 1024, 1024
          %355 = vsyncadd %s348, %s354
          %s356 = smul.addr %s352, 64
          %s357 = scalar_lea.hbm %s2, %s356
          %s358 = sshll.u32 %s351, 4
          %s359 = int_to_ptr.vmem [resolvable:$true] %s358
          %364 = dma.hbm_to_vmem [thread:$0]  %s357, 1024, %s359, %s348, 64, 64, 4
        $region28: #{tpu_custom_call.1} parent=15 // pred_fallthru
          _
      $region16: #{tpu_custom_call.1} parent=5 // pred_fallthru
        _
      %p365 = scmp.le.s32.totalorder 1, %s33
      %p366 = scmp.lt.s32.totalorder %s33, 5
      %p367 = pnand %p365, %p366
      %p368 = pneg %p367
      // Predicated region
      $region29: #{tpu_custom_call.1} parent=5 // pred_check
        _
      $region30: #{tpu_custom_call.1} parent=5 // pred_check_branch
        %370 = sbr.rel (%p367) target = $region32
      $region31: #{tpu_custom_call.1} parent=5 // pred_region
        %s371 = ssub.s32 %s33, 1
        %s372 = sand.u32 %s60, 1
        %s373 = scalar_lea.sflag [#allocation5], %s372
        %s374 = sand.u32 %s60, 1
        %s375 = smul.addr %s374, 64
        %s376 = scalar_lea.vmem [#allocation4], %s375
        // Predicated region
        $region33: #{tpu_custom_call.1} parent=31 // pred_check
          %p377 = pneg %p73
        $region34: #{tpu_custom_call.1} parent=31 // pred_check_branch
          %379 = sbr.rel (%p377) target = $region36
        $region35: #{tpu_custom_call.1} parent=31 // pred_region
          %380 = dma.done %s373, 1024
        $region36: #{tpu_custom_call.1} parent=31 // pred_fallthru
          _
        %s381 = sand.u32 %s38, 1
        %s382 = scalar_lea.sflag [#allocation8], %s381
        %s383 = sand.u32 %s86, 1
        %s384 = smul.addr %s383, 64
        %s385 = scalar_lea.vmem [#allocation7], %s384
        // Predicated region
        $region37: #{tpu_custom_call.1} parent=31 // pred_check
          %p386 = pneg %p99
        $region38: #{tpu_custom_call.1} parent=31 // pred_check_branch
          %388 = sbr.rel (%p386) target = $region40
        $region39: #{tpu_custom_call.1} parent=31 // pred_region
          %389 = dma.done %s382, 1024
        $region40: #{tpu_custom_call.1} parent=31 // pred_fallthru
          _
        %s390 = sand.u32 %s38, 1
        %s391 = scalar_lea.sflag [#allocation8], %s390
        %s392 = sand.u32 %s112, 1
        %s393 = smul.addr %s392, 64
        %s394 = scalar_lea.vmem [#allocation9], %s393
        // Predicated region
        $region41: #{tpu_custom_call.1} parent=31 // pred_check
          %p395 = pneg %p125
        $region42: #{tpu_custom_call.1} parent=31 // pred_check_branch
          %397 = sbr.rel (%p395) target = $region44
        $region43: #{tpu_custom_call.1} parent=31 // pred_region
          %398 = dma.done %s391, 1024
        $region44: #{tpu_custom_call.1} parent=31 // pred_fallthru
          _
        %s399 = sand.u32 %s60, 1
        %s400 = scalar_lea.sflag [#allocation5], %s399
        %s401 = sand.u32 %s60, 1
        %s402 = smul.addr %s401, 64
        %s403 = scalar_lea.vmem [#allocation4], %s402
        %p404 = pneg %p73
        %p405 = pneg %p70
        %s406 = sand.u32 %s38, 1
        %s407 = scalar_lea.sflag [#allocation8], %s406
        %s408 = sand.u32 %s86, 1
        %s409 = smul.addr %s408, 64
        %s410 = scalar_lea.vmem [#allocation7], %s409
        %p411 = pneg %p99
        %p412 = pneg %p96
        %s413 = sand.u32 %s38, 1
        %s414 = scalar_lea.sflag [#allocation8], %s413
        %s415 = sand.u32 %s112, 1
        %s416 = smul.addr %s415, 64
        %s417 = scalar_lea.vmem [#allocation9], %s416
        %p418 = pneg %p125
        %p419 = pneg %p122
        %p420 = pneg %p151
        %p421 = pneg %p148
        %s422 = sand.u32 %s138, 1
        %s423 = scalar_lea.sflag [#allocation6], %s422
        %s424 = sand.u32 %s138, 1
        %s425 = smul.addr %s424, 64
        %s426 = scalar_lea.vmem [#allocation10], %s425
        %p427 = pneg %p177
        %p428 = pneg %p174
        %s429 = sand.u32 %s38, 1
        %s430 = scalar_lea.sflag [#allocation12], %s429
        %s431 = sand.u32 %s164, 1
        %s432 = smul.addr %s431, 64
        %s433 = scalar_lea.vmem [#allocation11], %s432
        %p434 = pneg %p203
        %p435 = pneg %p200
        %s436 = sand.u32 %s38, 1
        %s437 = scalar_lea.sflag [#allocation12], %s436
        %s438 = sand.u32 %s190, 1
        %s439 = scalar_lea.vmem [#allocation13], %s438
        %p440 = pneg %p229
        %p441 = pneg %p226
        %s442 = sand.u32 %s38, 1
        %s443 = scalar_lea.sflag [#allocation15], %s442
        %s444 = sand.u32 %s216, 1
        %s445 = scalar_lea.vmem [#allocation14], %s444
        %p446 = pneg %p255
        %p447 = pneg %p252
        %s448 = sand.u32 %s38, 1
        %s449 = scalar_lea.sflag [#allocation15], %s448
        %s450 = sand.u32 %s242, 1
        %s451 = scalar_lea.vmem [#allocation16], %s450
        %p452 = pneg %p281
        %p453 = pneg %p278
        %s454 = sand.u32 %s268, 1
        %s455 = scalar_lea.sflag [#allocation18], %s454
        %s456 = sand.u32 %s268, 1
        %s457 = scalar_lea.vmem [#allocation17], %s456
        %s458 = smul.u32 16, %s42
        %s459 = smul.u32 16, %s43
        %s460 = smul.u32 16, %s43
        %s461 = smul.u32 16, %s42
        %s462 = smul.u32 16, %s42
        %v464 = vld [vmem:[%s376] sm:$0xf]
        %v465 = vld [vmem:[%s376 + $0x4] sm:$0xf]
        %v466 = vld [vmem:[%s376 + $0x8] sm:$0xf]
        %v467 = vld [vmem:[%s376 + $0xc] sm:$0xf]
        %v468 = vld [vmem:[%s376 + $0x10] sm:$0xf]
        %v469 = vld [vmem:[%s376 + $0x14] sm:$0xf]
        %v470 = vld [vmem:[%s376 + $0x18] sm:$0xf]
        %v471 = vld [vmem:[%s376 + $0x1c] sm:$0xf]
        %v472 = vld [vmem:[%s376 + $0x20] sm:$0xf]
        %v473 = vld [vmem:[%s376 + $0x24] sm:$0xf]
        %v474 = vld [vmem:[%s376 + $0x28] sm:$0xf]
        %v475 = vld [vmem:[%s376 + $0x2c] sm:$0xf]
        %v476 = vld [vmem:[%s376 + $0x30] sm:$0xf]
        %v477 = vld [vmem:[%s376 + $0x34] sm:$0xf]
        %v478 = vld [vmem:[%s376 + $0x38] sm:$0xf]
        %v479 = vld [vmem:[%s376 + $0x3c] sm:$0xf]
        %p480 = scmp.eq.s32.totalorder %s43, 0
        // Predicated region
        $region45: #{tpu_custom_call.1} parent=31 // pred_check
          %p481 = pneg %p480
        $region46: #{tpu_custom_call.1} parent=31 // pred_check_branch
          %483 = sbr.rel (%p481) target = $region48
        $region47: #{tpu_custom_call.1} parent=31 // pred_region
          %484 = vst [vmem:[#allocation2] sm:$0xff] 0.0
          %485 = vst [vmem:[#allocation2 + $0x8] sm:$0xff] 0.0
          %486 = vst [vmem:[#allocation2 + $0x10] sm:$0xff] 0.0
          %487 = vst [vmem:[#allocation2 + $0x18] sm:$0xff] 0.0
          %488 = vst [vmem:[#allocation2 + $0x20] sm:$0xff] 0.0
          %489 = vst [vmem:[#allocation2 + $0x28] sm:$0xff] 0.0
          %490 = vst [vmem:[#allocation2 + $0x30] sm:$0xff] 0.0
          %491 = vst [vmem:[#allocation2 + $0x38] sm:$0xff] 0.0
          %492 = vst [vmem:[#allocation2 + $0x40] sm:$0xff] 0.0
          %493 = vst [vmem:[#allocation2 + $0x48] sm:$0xff] 0.0
          %494 = vst [vmem:[#allocation2 + $0x50] sm:$0xff] 0.0
          %495 = vst [vmem:[#allocation2 + $0x58] sm:$0xff] 0.0
          %496 = vst [vmem:[#allocation2 + $0x60] sm:$0xff] 0.0
          %497 = vst [vmem:[#allocation2 + $0x68] sm:$0xff] 0.0
          %498 = vst [vmem:[#allocation2 + $0x70] sm:$0xff] 0.0
          %499 = vst [vmem:[#allocation2 + $0x78] sm:$0xff] 0.0
          %500 = vst [vmem:[#allocation3] sm:$0xff] 0.0
          %501 = vst [vmem:[#allocation3 + $0x8] sm:$0xff] 0.0
          %502 = vst [vmem:[#allocation3 + $0x10] sm:$0xff] 0.0
          %503 = vst [vmem:[#allocation3 + $0x18] sm:$0xff] 0.0
          %504 = vst [vmem:[#allocation3 + $0x20] sm:$0xff] 0.0
          %505 = vst [vmem:[#allocation3 + $0x28] sm:$0xff] 0.0
          %506 = vst [vmem:[#allocation3 + $0x30] sm:$0xff] 0.0
          %507 = vst [vmem:[#allocation3 + $0x38] sm:$0xff] 0.0
          %508 = vst [vmem:[#allocation3 + $0x40] sm:$0xff] 0.0
          %509 = vst [vmem:[#allocation3 + $0x48] sm:$0xff] 0.0
          %510 = vst [vmem:[#allocation3 + $0x50] sm:$0xff] 0.0
          %511 = vst [vmem:[#allocation3 + $0x58] sm:$0xff] 0.0
          %512 = vst [vmem:[#allocation3 + $0x60] sm:$0xff] 0.0
          %513 = vst [vmem:[#allocation3 + $0x68] sm:$0xff] 0.0
          %514 = vst [vmem:[#allocation3 + $0x70] sm:$0xff] 0.0
          %515 = vst [vmem:[#allocation3 + $0x78] sm:$0xff] 0.0
        $region48: #{tpu_custom_call.1} parent=31 // pred_fallthru
          _
        %v516 = vld [vmem:[#allocation2] sm:$0xff]
        %v517 = vld [vmem:[#allocation2 + $0x8] sm:$0xff]
        %v518 = vld [vmem:[#allocation2 + $0x10] sm:$0xff]
        %v519 = vld [vmem:[#allocation2 + $0x18] sm:$0xff]
        %v520 = vld [vmem:[#allocation2 + $0x20] sm:$0xff]
        %v521 = vld [vmem:[#allocation2 + $0x28] sm:$0xff]
        %v522 = vld [vmem:[#allocation2 + $0x30] sm:$0xff]
        %v523 = vld [vmem:[#allocation2 + $0x38] sm:$0xff]
        %v524 = vld [vmem:[#allocation2 + $0x40] sm:$0xff]
        %v525 = vld [vmem:[#allocation2 + $0x48] sm:$0xff]
        %v526 = vld [vmem:[#allocation2 + $0x50] sm:$0xff]
        %v527 = vld [vmem:[#allocation2 + $0x58] sm:$0xff]
        %v528 = vld [vmem:[#allocation2 + $0x60] sm:$0xff]
        %v529 = vld [vmem:[#allocation2 + $0x68] sm:$0xff]
        %v530 = vld [vmem:[#allocation2 + $0x70] sm:$0xff]
        %v531 = vld [vmem:[#allocation2 + $0x78] sm:$0xff]
        %v532 = vld [vmem:[%s385] sm:$0xf]
        %v533 = vld [vmem:[%s385 + $0x4] sm:$0xf]
        %v534 = vld [vmem:[%s385 + $0x8] sm:$0xf]
        %v535 = vld [vmem:[%s385 + $0xc] sm:$0xf]
        %v536 = vld [vmem:[%s385 + $0x10] sm:$0xf]
        %v537 = vld [vmem:[%s385 + $0x14] sm:$0xf]
        %v538 = vld [vmem:[%s385 + $0x18] sm:$0xf]
        %v539 = vld [vmem:[%s385 + $0x1c] sm:$0xf]
        %v540 = vld [vmem:[%s385 + $0x20] sm:$0xf]
        %v541 = vld [vmem:[%s385 + $0x24] sm:$0xf]
        %v542 = vld [vmem:[%s385 + $0x28] sm:$0xf]
        %v543 = vld [vmem:[%s385 + $0x2c] sm:$0xf]
        %v544 = vld [vmem:[%s385 + $0x30] sm:$0xf]
        %v545 = vld [vmem:[%s385 + $0x34] sm:$0xf]
        %v546 = vld [vmem:[%s385 + $0x38] sm:$0xf]
        %v547 = vld [vmem:[%s385 + $0x3c] sm:$0xf]
        %v564 = vunpack.c.l.b16 %v464
        %v565 = vunpack.c.l.b16 %v465
        %v566 = vunpack.c.l.b16 %v466
        %v567 = vunpack.c.l.b16 %v467
        %v568 = vunpack.c.l.b16 %v468
        %v569 = vunpack.c.l.b16 %v469
        %v570 = vunpack.c.l.b16 %v470
        %v571 = vunpack.c.l.b16 %v471
        %v572 = vunpack.c.l.b16 %v472
        %v573 = vunpack.c.l.b16 %v473
        %v574 = vunpack.c.l.b16 %v474
        %v575 = vunpack.c.l.b16 %v475
        %v576 = vunpack.c.l.b16 %v476
        %v577 = vunpack.c.l.b16 %v477
        %v578 = vunpack.c.l.b16 %v478
        %v579 = vunpack.c.l.b16 %v479
        %v580 = vpack.c.b16 %v565, %v564
        %v581 = vpack.c.b16 %v567, %v566
        %v582 = vpack.c.b16 %v569, %v568
        %v583 = vpack.c.b16 %v571, %v570
        %v584 = vpack.c.b16 %v573, %v572
        %v585 = vpack.c.b16 %v575, %v574
        %v586 = vpack.c.b16 %v577, %v576
        %v587 = vpack.c.b16 %v579, %v578
        %v612 = vunpack.c.l.b16 %v532
        %v613 = vunpack.c.l.b16 %v533
        %v614 = vunpack.c.l.b16 %v534
        %v615 = vunpack.c.l.b16 %v535
        %v616 = vunpack.c.l.b16 %v536
        %v617 = vunpack.c.l.b16 %v537
        %v618 = vunpack.c.l.b16 %v538
        %v619 = vunpack.c.l.b16 %v539
        %v620 = vunpack.c.l.b16 %v540
        %v621 = vunpack.c.l.b16 %v541
        %v622 = vunpack.c.l.b16 %v542
        %v623 = vunpack.c.l.b16 %v543
        %v624 = vunpack.c.l.b16 %v544
        %v625 = vunpack.c.l.b16 %v545
        %v626 = vunpack.c.l.b16 %v546
        %v627 = vunpack.c.l.b16 %v547
        %v628 = vpack.c.b16 %v613, %v612
        %v629 = vpack.c.b16 %v615, %v614
        %v630 = vpack.c.b16 %v617, %v616
        %v631 = vpack.c.b16 %v619, %v618
        %v632 = vpack.c.b16 %v621, %v620
        %v633 = vpack.c.b16 %v623, %v622
        %v634 = vpack.c.b16 %v625, %v624
        %v635 = vpack.c.b16 %v627, %v626
        %644 = vmatprep.subr.bf16.mxu0 0
        %645 = vmatpush1.bf16.msra.mxu0 %v628
        %646 = vmatprep.subr.bf16.mxu0 0
        %647 = vmatpush1.bf16.msra.mxu0 %v629
        %648 = vmatprep.subr.bf16.mxu0 0
        %649 = vmatpush1.bf16.msra.mxu0 %v630
        %650 = vmatprep.subr.bf16.mxu0 0
        %651 = vmatpush1.bf16.msra.mxu0 %v631
        %652 = vmatprep.subr.bf16.mxu0 0
        %653 = vmatpush1.bf16.msra.mxu0 %v632
        %654 = vmatprep.subr.bf16.mxu0 0
        %655 = vmatpush1.bf16.msra.mxu0 %v633
        %656 = vmatprep.subr.bf16.mxu0 0
        %657 = vmatpush1.bf16.msra.mxu0 %v634
        %658 = vmatprep.subr.bf16.mxu0 0
        %659 = vmatpush1.bf16.msra.mxu0 %v635
        %660 = vmatprep.subr.bf16.mxu0 0
        %661 = vmatpush1.bf16.msra.mxu0 0
        %662 = vmatprep.subr.bf16.mxu0 0
        %663 = vmatpush1.bf16.msra.mxu0 0
        %664 = vmatprep.subr.bf16.mxu0 0
        %665 = vmatpush1.bf16.msra.mxu0 0
        %666 = vmatprep.subr.bf16.mxu0 0
        %667 = vmatpush1.bf16.msra.mxu0 0
        %668 = vmatprep.subr.bf16.mxu0 0
        %669 = vmatpush1.bf16.msra.mxu0 0
        %670 = vmatprep.subr.bf16.mxu0 0
        %671 = vmatpush1.bf16.msra.mxu0 0
        %672 = vmatprep.subr.bf16.mxu0 0
        %673 = vmatpush1.bf16.msra.mxu0 0
        %674 = vmatprep.subr.bf16.mxu0 0
        %675 = vmatpush1.bf16.msra.mxu0 0
        %676 = vmatprep.mubr.bf16.mxu0 0
        %677 = vmatmul.mubr.bf16.gmra.mrb[0].mxu0 %v580
        %v678 = vpop.f32.mrb[0].mxu0
        %v679 = vadd.f32 0.0, %v678
        %v680 = vpop.f32.mrb[0].mxu0
        %v681 = vpop.f32.mrb[0].mxu0
        %v682 = vadd.f32 0.0, %v681
        %v683 = vpop.f32.mrb[0].mxu0
        %684 = vmatprep.mubr.bf16.mxu0 0
        %685 = vmatmul.mubr.bf16.gmra.mrb[0].mxu0 %v581
        %v686 = vpop.f32.mrb[0].mxu0
        %v687 = vadd.f32 0.0, %v686
        %v688 = vpop.f32.mrb[0].mxu0
        %v689 = vpop.f32.mrb[0].mxu0
        %v690 = vadd.f32 0.0, %v689
        %v691 = vpop.f32.mrb[0].mxu0
        %692 = vmatprep.mubr.bf16.mxu0 0
        %693 = vmatmul.mubr.bf16.gmra.mrb[0].mxu0 %v582
        %v694 = vpop.f32.mrb[0].mxu0
        %v695 = vadd.f32 0.0, %v694
        %v696 = vpop.f32.mrb[0].mxu0
        %v697 = vpop.f32.mrb[0].mxu0
        %v698 = vadd.f32 0.0, %v697
        %v699 = vpop.f32.mrb[0].mxu0
        %700 = vmatprep.mubr.bf16.mxu0 0
        %701 = vmatmul.mubr.bf16.gmra.mrb[0].mxu0 %v583
        %v702 = vpop.f32.mrb[0].mxu0
        %v703 = vadd.f32 0.0, %v702
        %v704 = vpop.f32.mrb[0].mxu0
        %v705 = vpop.f32.mrb[0].mxu0
        %v706 = vadd.f32 0.0, %v705
        %v707 = vpop.f32.mrb[0].mxu0
        %708 = vmatprep.mubr.bf16.mxu0 0
        %709 = vmatmul.mubr.bf16.gmra.mrb[0].mxu0 %v584
        %v710 = vpop.f32.mrb[0].mxu0
        %v711 = vadd.f32 0.0, %v710
        %v712 = vpop.f32.mrb[0].mxu0
        %v713 = vpop.f32.mrb[0].mxu0
        %v714 = vadd.f32 0.0, %v713
        %v715 = vpop.f32.mrb[0].mxu0
        %716 = vmatprep.mubr.bf16.mxu0 0
        %717 = vmatmul.mubr.bf16.gmra.mrb[0].mxu0 %v585
        %v718 = vpop.f32.mrb[0].mxu0
        %v719 = vadd.f32 0.0, %v718
        %v720 = vpop.f32.mrb[0].mxu0
        %v721 = vpop.f32.mrb[0].mxu0
        %v722 = vadd.f32 0.0, %v721
        %v723 = vpop.f32.mrb[0].mxu0
        %724 = vmatprep.mubr.bf16.mxu0 0
        %725 = vmatmul.mubr.bf16.gmra.mrb[0].mxu0 %v586
        %v726 = vpop.f32.mrb[0].mxu0
        %v727 = vadd.f32 0.0, %v726
        %v728 = vpop.f32.mrb[0].mxu0
        %v729 = vpop.f32.mrb[0].mxu0
        %v730 = vadd.f32 0.0, %v729
        %v731 = vpop.f32.mrb[0].mxu0
        %732 = vmatprep.mubr.bf16.mxu0 0
        %733 = vmatmul.mubr.bf16.gmra.mrb[0].mxu0 %v587
        %v734 = vpop.f32.mrb[0].mxu0
        %v735 = vadd.f32 0.0, %v734
        %v736 = vpop.f32.mrb[0].mxu0
        %v737 = vpop.f32.mrb[0].mxu0
        %v738 = vadd.f32 0.0, %v737
        %v739 = vpop.f32.mrb[0].mxu0
        %740 = vdwg.mxu0
        %v741 = vadd.f32 %v516, %v679
        %v742 = vadd.f32 %v517, %v682
        %v743 = vadd.f32 %v518, %v687
        %v744 = vadd.f32 %v519, %v690
        %v745 = vadd.f32 %v520, %v695
        %v746 = vadd.f32 %v521, %v698
        %v747 = vadd.f32 %v522, %v703
        %v748 = vadd.f32 %v523, %v706
        %v749 = vadd.f32 %v524, %v711
        %v750 = vadd.f32 %v525, %v714
        %v751 = vadd.f32 %v526, %v719
        %v752 = vadd.f32 %v527, %v722
        %v753 = vadd.f32 %v528, %v727
        %v754 = vadd.f32 %v529, %v730
        %v755 = vadd.f32 %v530, %v735
        %v756 = vadd.f32 %v531, %v738
        %757 = vst [vmem:[#allocation2] sm:$0xff] %v741
        %758 = vst [vmem:[#allocation2 + $0x8] sm:$0xff] %v742
        %759 = vst [vmem:[#allocation2 + $0x10] sm:$0xff] %v743
        %760 = vst [vmem:[#allocation2 + $0x18] sm:$0xff] %v744
        %761 = vst [vmem:[#allocation2 + $0x20] sm:$0xff] %v745
        %762 = vst [vmem:[#allocation2 + $0x28] sm:$0xff] %v746
        %763 = vst [vmem:[#allocation2 + $0x30] sm:$0xff] %v747
        %764 = vst [vmem:[#allocation2 + $0x38] sm:$0xff] %v748
        %765 = vst [vmem:[#allocation2 + $0x40] sm:$0xff] %v749
        %766 = vst [vmem:[#allocation2 + $0x48] sm:$0xff] %v750
        %767 = vst [vmem:[#allocation2 + $0x50] sm:$0xff] %v751
        %768 = vst [vmem:[#allocation2 + $0x58] sm:$0xff] %v752
        %769 = vst [vmem:[#allocation2 + $0x60] sm:$0xff] %v753
        %770 = vst [vmem:[#allocation2 + $0x68] sm:$0xff] %v754
        %771 = vst [vmem:[#allocation2 + $0x70] sm:$0xff] %v755
        %772 = vst [vmem:[#allocation2 + $0x78] sm:$0xff] %v756
        %v773 = vld [vmem:[#allocation3] sm:$0xff]
        %v774 = vld [vmem:[#allocation3 + $0x8] sm:$0xff]
        %v775 = vld [vmem:[#allocation3 + $0x10] sm:$0xff]
        %v776 = vld [vmem:[#allocation3 + $0x18] sm:$0xff]
        %v777 = vld [vmem:[#allocation3 + $0x20] sm:$0xff]
        %v778 = vld [vmem:[#allocation3 + $0x28] sm:$0xff]
        %v779 = vld [vmem:[#allocation3 + $0x30] sm:$0xff]
        %v780 = vld [vmem:[#allocation3 + $0x38] sm:$0xff]
        %v781 = vld [vmem:[#allocation3 + $0x40] sm:$0xff]
        %v782 = vld [vmem:[#allocation3 + $0x48] sm:$0xff]
        %v783 = vld [vmem:[#allocation3 + $0x50] sm:$0xff]
        %v784 = vld [vmem:[#allocation3 + $0x58] sm:$0xff]
        %v785 = vld [vmem:[#allocation3 + $0x60] sm:$0xff]
        %v786 = vld [vmem:[#allocation3 + $0x68] sm:$0xff]
        %v787 = vld [vmem:[#allocation3 + $0x70] sm:$0xff]
        %v788 = vld [vmem:[#allocation3 + $0x78] sm:$0xff]
        %v789 = vld [vmem:[%s394] sm:$0xf]
        %v790 = vld [vmem:[%s394 + $0x4] sm:$0xf]
        %v791 = vld [vmem:[%s394 + $0x8] sm:$0xf]
        %v792 = vld [vmem:[%s394 + $0xc] sm:$0xf]
        %v793 = vld [vmem:[%s394 + $0x10] sm:$0xf]
        %v794 = vld [vmem:[%s394 + $0x14] sm:$0xf]
        %v795 = vld [vmem:[%s394 + $0x18] sm:$0xf]
        %v796 = vld [vmem:[%s394 + $0x1c] sm:$0xf]
        %v797 = vld [vmem:[%s394 + $0x20] sm:$0xf]
        %v798 = vld [vmem:[%s394 + $0x24] sm:$0xf]
        %v799 = vld [vmem:[%s394 + $0x28] sm:$0xf]
        %v800 = vld [vmem:[%s394 + $0x2c] sm:$0xf]
        %v801 = vld [vmem:[%s394 + $0x30] sm:$0xf]
        %v802 = vld [vmem:[%s394 + $0x34] sm:$0xf]
        %v803 = vld [vmem:[%s394 + $0x38] sm:$0xf]
        %v804 = vld [vmem:[%s394 + $0x3c] sm:$0xf]
        %v821 = vunpack.c.l.b16 %v789
        %v822 = vunpack.c.l.b16 %v790
        %v823 = vunpack.c.l.b16 %v791
        %v824 = vunpack.c.l.b16 %v792
        %v825 = vunpack.c.l.b16 %v793
        %v826 = vunpack.c.l.b16 %v794
        %v827 = vunpack.c.l.b16 %v795
        %v828 = vunpack.c.l.b16 %v796
        %v829 = vunpack.c.l.b16 %v797
        %v830 = vunpack.c.l.b16 %v798
        %v831 = vunpack.c.l.b16 %v799
        %v832 = vunpack.c.l.b16 %v800
        %v833 = vunpack.c.l.b16 %v801
        %v834 = vunpack.c.l.b16 %v802
        %v835 = vunpack.c.l.b16 %v803
        %v836 = vunpack.c.l.b16 %v804
        %v837 = vpack.c.b16 %v822, %v821
        %v838 = vpack.c.b16 %v824, %v823
        %v839 = vpack.c.b16 %v826, %v825
        %v840 = vpack.c.b16 %v828, %v827
        %v841 = vpack.c.b16 %v830, %v829
        %v842 = vpack.c.b16 %v832, %v831
        %v843 = vpack.c.b16 %v834, %v833
        %v844 = vpack.c.b16 %v836, %v835
        %853 = vmatprep.subr.bf16.mxu0 0
        %854 = vmatpush1.bf16.msra.mxu0 %v837
        %855 = vmatprep.subr.bf16.mxu0 0
        %856 = vmatpush1.bf16.msra.mxu0 %v838
        %857 = vmatprep.subr.bf16.mxu0 0
        %858 = vmatpush1.bf16.msra.mxu0 %v839
        %859 = vmatprep.subr.bf16.mxu0 0
        %860 = vmatpush1.bf16.msra.mxu0 %v840
        %861 = vmatprep.subr.bf16.mxu0 0
        %862 = vmatpush1.bf16.msra.mxu0 %v841
        %863 = vmatprep.subr.bf16.mxu0 0
        %864 = vmatpush1.bf16.msra.mxu0 %v842
        %865 = vmatprep.subr.bf16.mxu0 0
        %866 = vmatpush1.bf16.msra.mxu0 %v843
        %867 = vmatprep.subr.bf16.mxu0 0
        %868 = vmatpush1.bf16.msra.mxu0 %v844
        %869 = vmatprep.subr.bf16.mxu0 0
        %870 = vmatpush1.bf16.msra.mxu0 0
        %871 = vmatprep.subr.bf16.mxu0 0
        %872 = vmatpush1.bf16.msra.mxu0 0
        %873 = vmatprep.subr.bf16.mxu0 0
        %874 = vmatpush1.bf16.msra.mxu0 0
        %875 = vmatprep.subr.bf16.mxu0 0
        %876 = vmatpush1.bf16.msra.mxu0 0
        %877 = vmatprep.subr.bf16.mxu0 0
        %878 = vmatpush1.bf16.msra.mxu0 0
        %879 = vmatprep.subr.bf16.mxu0 0
        %880 = vmatpush1.bf16.msra.mxu0 0
        %881 = vmatprep.subr.bf16.mxu0 0
        %882 = vmatpush1.bf16.msra.mxu0 0
        %883 = vmatprep.subr.bf16.mxu0 0
        %884 = vmatpush1.bf16.msra.mxu0 0
        %885 = vmatprep.mubr.bf16.mxu0 0
        %886 = vmatmul.mubr.bf16.gmra.mrb[0].mxu0 %v580
        %v887 = vpop.f32.mrb[0].mxu0
        %v888 = vadd.f32 0.0, %v887
        %v889 = vpop.f32.mrb[0].mxu0
        %v890 = vpop.f32.mrb[0].mxu0
        %v891 = vadd.f32 0.0, %v890
        %v892 = vpop.f32.mrb[0].mxu0
        %893 = vmatprep.mubr.bf16.mxu0 0
        %894 = vmatmul.mubr.bf16.gmra.mrb[0].mxu0 %v581
        %v895 = vpop.f32.mrb[0].mxu0
        %v896 = vadd.f32 0.0, %v895
        %v897 = vpop.f32.mrb[0].mxu0
        %v898 = vpop.f32.mrb[0].mxu0
        %v899 = vadd.f32 0.0, %v898
        %v900 = vpop.f32.mrb[0].mxu0
        %901 = vmatprep.mubr.bf16.mxu0 0
        %902 = vmatmul.mubr.bf16.gmra.mrb[0].mxu0 %v582
        %v903 = vpop.f32.mrb[0].mxu0
        %v904 = vadd.f32 0.0, %v903
        %v905 = vpop.f32.mrb[0].mxu0
        %v906 = vpop.f32.mrb[0].mxu0
        %v907 = vadd.f32 0.0, %v906
        %v908 = vpop.f32.mrb[0].mxu0
        %909 = vmatprep.mubr.bf16.mxu0 0
        %910 = vmatmul.mubr.bf16.gmra.mrb[0].mxu0 %v583
        %v911 = vpop.f32.mrb[0].mxu0
        %v912 = vadd.f32 0.0, %v911
        %v913 = vpop.f32.mrb[0].mxu0
        %v914 = vpop.f32.mrb[0].mxu0
        %v915 = vadd.f32 0.0, %v914
        %v916 = vpop.f32.mrb[0].mxu0
        %917 = vmatprep.mubr.bf16.mxu0 0
        %918 = vmatmul.mubr.bf16.gmra.mrb[0].mxu0 %v584
        %v919 = vpop.f32.mrb[0].mxu0
        %v920 = vadd.f32 0.0, %v919
        %v921 = vpop.f32.mrb[0].mxu0
        %v922 = vpop.f32.mrb[0].mxu0
        %v923 = vadd.f32 0.0, %v922
        %v924 = vpop.f32.mrb[0].mxu0
        %925 = vmatprep.mubr.bf16.mxu0 0
        %926 = vmatmul.mubr.bf16.gmra.mrb[0].mxu0 %v585
        %v927 = vpop.f32.mrb[0].mxu0
        %v928 = vadd.f32 0.0, %v927
        %v929 = vpop.f32.mrb[0].mxu0
        %v930 = vpop.f32.mrb[0].mxu0
        %v931 = vadd.f32 0.0, %v930
        %v932 = vpop.f32.mrb[0].mxu0
        %933 = vmatprep.mubr.bf16.mxu0 0
        %934 = vmatmul.mubr.bf16.gmra.mrb[0].mxu0 %v586
        %v935 = vpop.f32.mrb[0].mxu0
        %v936 = vadd.f32 0.0, %v935
        %v937 = vpop.f32.mrb[0].mxu0
        %v938 = vpop.f32.mrb[0].mxu0
        %v939 = vadd.f32 0.0, %v938
        %v940 = vpop.f32.mrb[0].mxu0
        %941 = vmatprep.mubr.bf16.mxu0 0
        %942 = vmatmul.mubr.bf16.gmra.mrb[0].mxu0 %v587
        %v943 = vpop.f32.mrb[0].mxu0
        %v944 = vadd.f32 0.0, %v943
        %v945 = vpop.f32.mrb[0].mxu0
        %v946 = vpop.f32.mrb[0].mxu0
        %v947 = vadd.f32 0.0, %v946
        %v948 = vpop.f32.mrb[0].mxu0
        %949 = vdwg.mxu0
        %v950 = vadd.f32 %v773, %v888
        %v951 = vadd.f32 %v774, %v891
        %v952 = vadd.f32 %v775, %v896
        %v953 = vadd.f32 %v776, %v899
        %v954 = vadd.f32 %v777, %v904
        %v955 = vadd.f32 %v778, %v907
        %v956 = vadd.f32 %v779, %v912
        %v957 = vadd.f32 %v780, %v915
        %v958 = vadd.f32 %v781, %v920
        %v959 = vadd.f32 %v782, %v923
        %v960 = vadd.f32 %v783, %v928
        %v961 = vadd.f32 %v784, %v931
        %v962 = vadd.f32 %v785, %v936
        %v963 = vadd.f32 %v786, %v939
        %v964 = vadd.f32 %v787, %v944
        %v965 = vadd.f32 %v788, %v947
        %966 = vst [vmem:[#allocation3] sm:$0xff] %v950
        %967 = vst [vmem:[#allocation3 + $0x8] sm:$0xff] %v951
        %968 = vst [vmem:[#allocation3 + $0x10] sm:$0xff] %v952
        %969 = vst [vmem:[#allocation3 + $0x18] sm:$0xff] %v953
        %970 = vst [vmem:[#allocation3 + $0x20] sm:$0xff] %v954
        %971 = vst [vmem:[#allocation3 + $0x28] sm:$0xff] %v955
        %972 = vst [vmem:[#allocation3 + $0x30] sm:$0xff] %v956
        %973 = vst [vmem:[#allocation3 + $0x38] sm:$0xff] %v957
        %974 = vst [vmem:[#allocation3 + $0x40] sm:$0xff] %v958
        %975 = vst [vmem:[#allocation3 + $0x48] sm:$0xff] %v959
        %976 = vst [vmem:[#allocation3 + $0x50] sm:$0xff] %v960
        %977 = vst [vmem:[#allocation3 + $0x58] sm:$0xff] %v961
        %978 = vst [vmem:[#allocation3 + $0x60] sm:$0xff] %v962
        %979 = vst [vmem:[#allocation3 + $0x68] sm:$0xff] %v963
        %980 = vst [vmem:[#allocation3 + $0x70] sm:$0xff] %v964
        %981 = vst [vmem:[#allocation3 + $0x78] sm:$0xff] %v965
        %p982 = scmp.eq.s32.totalorder %s43, 1
        // Predicated region
        $region49: #{tpu_custom_call.1} parent=31 // pred_check
          %p983 = pneg %p982
        $region50: #{tpu_custom_call.1} parent=31 // pred_check_branch
          %985 = sbr.rel (%p983) target = $region52
        $region51: #{tpu_custom_call.1} parent=31 // pred_region
          %v986 = vld [vmem:[#allocation2] sm:$0xff]
          %v987 = vld [vmem:[#allocation2 + $0x8] sm:$0xff]
          %v988 = vld [vmem:[#allocation2 + $0x10] sm:$0xff]
          %v989 = vld [vmem:[#allocation2 + $0x18] sm:$0xff]
          %v990 = vld [vmem:[#allocation2 + $0x20] sm:$0xff]
          %v991 = vld [vmem:[#allocation2 + $0x28] sm:$0xff]
          %v992 = vld [vmem:[#allocation2 + $0x30] sm:$0xff]
          %v993 = vld [vmem:[#allocation2 + $0x38] sm:$0xff]
          %v994 = vld [vmem:[#allocation2 + $0x40] sm:$0xff]
          %v995 = vld [vmem:[#allocation2 + $0x48] sm:$0xff]
          %v996 = vld [vmem:[#allocation2 + $0x50] sm:$0xff]
          %v997 = vld [vmem:[#allocation2 + $0x58] sm:$0xff]
          %v998 = vld [vmem:[#allocation2 + $0x60] sm:$0xff]
          %v999 = vld [vmem:[#allocation2 + $0x68] sm:$0xff]
          %v1000 = vld [vmem:[#allocation2 + $0x70] sm:$0xff]
          %v1001 = vld [vmem:[#allocation2 + $0x78] sm:$0xff]
          %v1002 = vpack.c.bf16 %v987, %v986
          %v1003 = vpack.c.bf16 %v989, %v988
          %v1004 = vpack.c.bf16 %v991, %v990
          %v1005 = vpack.c.bf16 %v993, %v992
          %v1006 = vpack.c.bf16 %v995, %v994
          %v1007 = vpack.c.bf16 %v997, %v996
          %v1008 = vpack.c.bf16 %v999, %v998
          %v1009 = vpack.c.bf16 %v1001, %v1000
          %v1018 = vunpack.c.l.b16 %v1002
          %v1019 = vunpack.c.h.b16 %v1002
          %v1020 = vunpack.c.l.b16 %v1003
          %v1021 = vunpack.c.h.b16 %v1003
          %v1022 = vunpack.c.l.b16 %v1004
          %v1023 = vunpack.c.h.b16 %v1004
          %v1024 = vunpack.c.l.b16 %v1005
          %v1025 = vunpack.c.h.b16 %v1005
          %v1026 = vunpack.c.l.b16 %v1006
          %v1027 = vunpack.c.h.b16 %v1006
          %v1028 = vunpack.c.l.b16 %v1007
          %v1029 = vunpack.c.h.b16 %v1007
          %v1030 = vunpack.c.l.b16 %v1008
          %v1031 = vunpack.c.h.b16 %v1008
          %v1032 = vunpack.c.l.b16 %v1009
          %v1033 = vunpack.c.h.b16 %v1009
          %v1034 = vpack.c.b16 %v1018, %v1018
          %v1035 = vpack.c.b16 %v1019, %v1019
          %v1036 = vpack.c.b16 %v1020, %v1020
          %v1037 = vpack.c.b16 %v1021, %v1021
          %v1038 = vpack.c.b16 %v1022, %v1022
          %v1039 = vpack.c.b16 %v1023, %v1023
          %v1040 = vpack.c.b16 %v1024, %v1024
          %v1041 = vpack.c.b16 %v1025, %v1025
          %v1042 = vpack.c.b16 %v1026, %v1026
          %v1043 = vpack.c.b16 %v1027, %v1027
          %v1044 = vpack.c.b16 %v1028, %v1028
          %v1045 = vpack.c.b16 %v1029, %v1029
          %v1046 = vpack.c.b16 %v1030, %v1030
          %v1047 = vpack.c.b16 %v1031, %v1031
          %v1048 = vpack.c.b16 %v1032, %v1032
          %v1049 = vpack.c.b16 %v1033, %v1033
          %1066 = vst [vmem:[%s426] sm:$0xf] %v1034
          %1067 = vst [vmem:[%s426 + $0x4] sm:$0xf] %v1035
          %1068 = vst [vmem:[%s426 + $0x8] sm:$0xf] %v1036
          %1069 = vst [vmem:[%s426 + $0xc] sm:$0xf] %v1037
          %1070 = vst [vmem:[%s426 + $0x10] sm:$0xf] %v1038
          %1071 = vst [vmem:[%s426 + $0x14] sm:$0xf] %v1039
          %1072 = vst [vmem:[%s426 + $0x18] sm:$0xf] %v1040
          %1073 = vst [vmem:[%s426 + $0x1c] sm:$0xf] %v1041
          %1074 = vst [vmem:[%s426 + $0x20] sm:$0xf] %v1042
          %1075 = vst [vmem:[%s426 + $0x24] sm:$0xf] %v1043
          %1076 = vst [vmem:[%s426 + $0x28] sm:$0xf] %v1044
          %1077 = vst [vmem:[%s426 + $0x2c] sm:$0xf] %v1045
          %1078 = vst [vmem:[%s426 + $0x30] sm:$0xf] %v1046
          %1079 = vst [vmem:[%s426 + $0x34] sm:$0xf] %v1047
          %1080 = vst [vmem:[%s426 + $0x38] sm:$0xf] %v1048
          %1081 = vst [vmem:[%s426 + $0x3c] sm:$0xf] %v1049
          %v1082 = vadd.f32 %v986, %v987
          %v1083 = vadd.f32 %v1082, %v988
          %v1084 = vadd.f32 %v1083, %v989
          %v1085 = vadd.f32 %v1084, %v990
          %v1086 = vadd.f32 %v1085, %v991
          %v1087 = vadd.f32 %v1086, %v992
          %v1088 = vadd.f32 %v1087, %v993
          %v1089 = vadd.f32 %v1088, %v994
          %v1090 = vadd.f32 %v1089, %v995
          %v1091 = vadd.f32 %v1090, %v996
          %v1092 = vadd.f32 %v1091, %v997
          %v1093 = vadd.f32 %v1092, %v998
          %v1094 = vadd.f32 %v1093, %v999
          %v1095 = vadd.f32 %v1094, %v1000
          %v1096 = vadd.f32 %v1095, %v1001
          %v1097 = vrot.slane %v1096, 4
          %v1098 = vadd.f32 %v1096, %v1097
          %v1099 = vrot.slane %v1098, 2
          %v1100 = vadd.f32 %v1098, %v1099
          %v1101 = vrot.slane %v1100, 1
          %v1102 = vadd.f32 %v1100, %v1101
          %1103 = vst [vmem:[%s439] sm:$0x1] %v1102
          %v1104 = vmul.f32 %v986, %v986
          %v1105 = vmul.f32 %v987, %v987
          %v1106 = vmul.f32 %v988, %v988
          %v1107 = vmul.f32 %v989, %v989
          %v1108 = vmul.f32 %v990, %v990
          %v1109 = vmul.f32 %v991, %v991
          %v1110 = vmul.f32 %v992, %v992
          %v1111 = vmul.f32 %v993, %v993
          %v1112 = vmul.f32 %v994, %v994
          %v1113 = vmul.f32 %v995, %v995
          %v1114 = vmul.f32 %v996, %v996
          %v1115 = vmul.f32 %v997, %v997
          %v1116 = vmul.f32 %v998, %v998
          %v1117 = vmul.f32 %v999, %v999
          %v1118 = vmul.f32 %v1000, %v1000
          %v1119 = vmul.f32 %v1001, %v1001
          %v1120 = vadd.f32 %v1104, %v1105
          %v1121 = vadd.f32 %v1120, %v1106
          %v1122 = vadd.f32 %v1121, %v1107
          %v1123 = vadd.f32 %v1122, %v1108
          %v1124 = vadd.f32 %v1123, %v1109
          %v1125 = vadd.f32 %v1124, %v1110
          %v1126 = vadd.f32 %v1125, %v1111
          %v1127 = vadd.f32 %v1126, %v1112
          %v1128 = vadd.f32 %v1127, %v1113
          %v1129 = vadd.f32 %v1128, %v1114
          %v1130 = vadd.f32 %v1129, %v1115
          %v1131 = vadd.f32 %v1130, %v1116
          %v1132 = vadd.f32 %v1131, %v1117
          %v1133 = vadd.f32 %v1132, %v1118
          %v1134 = vadd.f32 %v1133, %v1119
          %v1135 = vrot.slane %v1134, 4
          %v1136 = vadd.f32 %v1134, %v1135
          %v1137 = vrot.slane %v1136, 2
          %v1138 = vadd.f32 %v1136, %v1137
          %v1139 = vrot.slane %v1138, 1
          %v1140 = vadd.f32 %v1138, %v1139
          %1141 = vst [vmem:[%s445] sm:$0x1] %v1140
          %v1142 = vld [vmem:[#allocation3] sm:$0xff]
          %v1143 = vld [vmem:[#allocation3 + $0x8] sm:$0xff]
          %v1144 = vld [vmem:[#allocation3 + $0x10] sm:$0xff]
          %v1145 = vld [vmem:[#allocation3 + $0x18] sm:$0xff]
          %v1146 = vld [vmem:[#allocation3 + $0x20] sm:$0xff]
          %v1147 = vld [vmem:[#allocation3 + $0x28] sm:$0xff]
          %v1148 = vld [vmem:[#allocation3 + $0x30] sm:$0xff]
          %v1149 = vld [vmem:[#allocation3 + $0x38] sm:$0xff]
          %v1150 = vld [vmem:[#allocation3 + $0x40] sm:$0xff]
          %v1151 = vld [vmem:[#allocation3 + $0x48] sm:$0xff]
          %v1152 = vld [vmem:[#allocation3 + $0x50] sm:$0xff]
          %v1153 = vld [vmem:[#allocation3 + $0x58] sm:$0xff]
          %v1154 = vld [vmem:[#allocation3 + $0x60] sm:$0xff]
          %v1155 = vld [vmem:[#allocation3 + $0x68] sm:$0xff]
          %v1156 = vld [vmem:[#allocation3 + $0x70] sm:$0xff]
          %v1157 = vld [vmem:[#allocation3 + $0x78] sm:$0xff]
          %v1158 = vpack.c.bf16 %v1143, %v1142
          %v1159 = vpack.c.bf16 %v1145, %v1144
          %v1160 = vpack.c.bf16 %v1147, %v1146
          %v1161 = vpack.c.bf16 %v1149, %v1148
          %v1162 = vpack.c.bf16 %v1151, %v1150
          %v1163 = vpack.c.bf16 %v1153, %v1152
          %v1164 = vpack.c.bf16 %v1155, %v1154
          %v1165 = vpack.c.bf16 %v1157, %v1156
          %v1174 = vunpack.c.l.b16 %v1158
          %v1175 = vunpack.c.h.b16 %v1158
          %v1176 = vunpack.c.l.b16 %v1159
          %v1177 = vunpack.c.h.b16 %v1159
          %v1178 = vunpack.c.l.b16 %v1160
          %v1179 = vunpack.c.h.b16 %v1160
          %v1180 = vunpack.c.l.b16 %v1161
          %v1181 = vunpack.c.h.b16 %v1161
          %v1182 = vunpack.c.l.b16 %v1162
          %v1183 = vunpack.c.h.b16 %v1162
          %v1184 = vunpack.c.l.b16 %v1163
          %v1185 = vunpack.c.h.b16 %v1163
          %v1186 = vunpack.c.l.b16 %v1164
          %v1187 = vunpack.c.h.b16 %v1164
          %v1188 = vunpack.c.l.b16 %v1165
          %v1189 = vunpack.c.h.b16 %v1165
          %v1190 = vpack.c.b16 %v1174, %v1174
          %v1191 = vpack.c.b16 %v1175, %v1175
          %v1192 = vpack.c.b16 %v1176, %v1176
          %v1193 = vpack.c.b16 %v1177, %v1177
          %v1194 = vpack.c.b16 %v1178, %v1178
          %v1195 = vpack.c.b16 %v1179, %v1179
          %v1196 = vpack.c.b16 %v1180, %v1180
          %v1197 = vpack.c.b16 %v1181, %v1181
          %v1198 = vpack.c.b16 %v1182, %v1182
          %v1199 = vpack.c.b16 %v1183, %v1183
          %v1200 = vpack.c.b16 %v1184, %v1184
          %v1201 = vpack.c.b16 %v1185, %v1185
          %v1202 = vpack.c.b16 %v1186, %v1186
          %v1203 = vpack.c.b16 %v1187, %v1187
          %v1204 = vpack.c.b16 %v1188, %v1188
          %v1205 = vpack.c.b16 %v1189, %v1189
          %1222 = vst [vmem:[%s433] sm:$0xf] %v1190
          %1223 = vst [vmem:[%s433 + $0x4] sm:$0xf] %v1191
          %1224 = vst [vmem:[%s433 + $0x8] sm:$0xf] %v1192
          %1225 = vst [vmem:[%s433 + $0xc] sm:$0xf] %v1193
          %1226 = vst [vmem:[%s433 + $0x10] sm:$0xf] %v1194
          %1227 = vst [vmem:[%s433 + $0x14] sm:$0xf] %v1195
          %1228 = vst [vmem:[%s433 + $0x18] sm:$0xf] %v1196
          %1229 = vst [vmem:[%s433 + $0x1c] sm:$0xf] %v1197
          %1230 = vst [vmem:[%s433 + $0x20] sm:$0xf] %v1198
          %1231 = vst [vmem:[%s433 + $0x24] sm:$0xf] %v1199
          %1232 = vst [vmem:[%s433 + $0x28] sm:$0xf] %v1200
          %1233 = vst [vmem:[%s433 + $0x2c] sm:$0xf] %v1201
          %1234 = vst [vmem:[%s433 + $0x30] sm:$0xf] %v1202
          %1235 = vst [vmem:[%s433 + $0x34] sm:$0xf] %v1203
          %1236 = vst [vmem:[%s433 + $0x38] sm:$0xf] %v1204
          %1237 = vst [vmem:[%s433 + $0x3c] sm:$0xf] %v1205
          %v1238 = vadd.f32 %v1142, %v1143
          %v1239 = vadd.f32 %v1238, %v1144
          %v1240 = vadd.f32 %v1239, %v1145
          %v1241 = vadd.f32 %v1240, %v1146
          %v1242 = vadd.f32 %v1241, %v1147
          %v1243 = vadd.f32 %v1242, %v1148
          %v1244 = vadd.f32 %v1243, %v1149
          %v1245 = vadd.f32 %v1244, %v1150
          %v1246 = vadd.f32 %v1245, %v1151
          %v1247 = vadd.f32 %v1246, %v1152
          %v1248 = vadd.f32 %v1247, %v1153
          %v1249 = vadd.f32 %v1248, %v1154
          %v1250 = vadd.f32 %v1249, %v1155
          %v1251 = vadd.f32 %v1250, %v1156
          %v1252 = vadd.f32 %v1251, %v1157
          %v1253 = vrot.slane %v1252, 4
          %v1254 = vadd.f32 %v1252, %v1253
          %v1255 = vrot.slane %v1254, 2
          %v1256 = vadd.f32 %v1254, %v1255
          %v1257 = vrot.slane %v1256, 1
          %v1258 = vadd.f32 %v1256, %v1257
          %1259 = vst [vmem:[%s451] sm:$0x1] %v1258
          %v1260 = vmul.f32 %v1142, %v1142
          %v1261 = vmul.f32 %v1143, %v1143
          %v1262 = vmul.f32 %v1144, %v1144
          %v1263 = vmul.f32 %v1145, %v1145
          %v1264 = vmul.f32 %v1146, %v1146
          %v1265 = vmul.f32 %v1147, %v1147
          %v1266 = vmul.f32 %v1148, %v1148
          %v1267 = vmul.f32 %v1149, %v1149
          %v1268 = vmul.f32 %v1150, %v1150
          %v1269 = vmul.f32 %v1151, %v1151
          %v1270 = vmul.f32 %v1152, %v1152
          %v1271 = vmul.f32 %v1153, %v1153
          %v1272 = vmul.f32 %v1154, %v1154
          %v1273 = vmul.f32 %v1155, %v1155
          %v1274 = vmul.f32 %v1156, %v1156
          %v1275 = vmul.f32 %v1157, %v1157
          %v1276 = vadd.f32 %v1260, %v1261
          %v1277 = vadd.f32 %v1276, %v1262
          %v1278 = vadd.f32 %v1277, %v1263
          %v1279 = vadd.f32 %v1278, %v1264
          %v1280 = vadd.f32 %v1279, %v1265
          %v1281 = vadd.f32 %v1280, %v1266
          %v1282 = vadd.f32 %v1281, %v1267
          %v1283 = vadd.f32 %v1282, %v1268
          %v1284 = vadd.f32 %v1283, %v1269
          %v1285 = vadd.f32 %v1284, %v1270
          %v1286 = vadd.f32 %v1285, %v1271
          %v1287 = vadd.f32 %v1286, %v1272
          %v1288 = vadd.f32 %v1287, %v1273
          %v1289 = vadd.f32 %v1288, %v1274
          %v1290 = vadd.f32 %v1289, %v1275
          %v1291 = vrot.slane %v1290, 4
          %v1292 = vadd.f32 %v1290, %v1291
          %v1293 = vrot.slane %v1292, 2
          %v1294 = vadd.f32 %v1292, %v1293
          %v1295 = vrot.slane %v1294, 1
          %v1296 = vadd.f32 %v1294, %v1295
          %1297 = vst [vmem:[%s457] sm:$0x1] %v1296
        $region52: #{tpu_custom_call.1} parent=31 // pred_fallthru
          _
        %s1298 = sand.u32 %s138, 1
        %s1299 = scalar_lea.sflag [#allocation6], %s1298
        %s1300 = sand.u32 %s138, 1
        %s1301 = smul.addr %s1300, 64
        %s1302 = scalar_lea.vmem [#allocation10], %s1301
        %s1303 = sand.u32 %s38, 1
        %s1304 = scalar_lea.sflag [#allocation12], %s1303
        %s1305 = sand.u32 %s164, 1
        %s1306 = smul.addr %s1305, 64
        %s1307 = scalar_lea.vmem [#allocation11], %s1306
        %s1308 = sand.u32 %s38, 1
        %s1309 = scalar_lea.sflag [#allocation12], %s1308
        %s1310 = sand.u32 %s190, 1
        %s1311 = scalar_lea.vmem [#allocation13], %s1310
        %s1312 = sand.u32 %s38, 1
        %s1313 = scalar_lea.sflag [#allocation15], %s1312
        %s1314 = sand.u32 %s216, 1
        %s1315 = scalar_lea.vmem [#allocation14], %s1314
        %s1316 = sand.u32 %s38, 1
        %s1317 = scalar_lea.sflag [#allocation15], %s1316
        %s1318 = sand.u32 %s242, 1
        %s1319 = scalar_lea.vmem [#allocation16], %s1318
        %s1320 = sand.u32 %s268, 1
        %s1321 = scalar_lea.sflag [#allocation18], %s1320
        %s1322 = sand.u32 %s268, 1
        %s1323 = scalar_lea.vmem [#allocation17], %s1322
        // Predicated region
        $region53: #{tpu_custom_call.1} parent=31 // pred_check
          %p1324 = pneg %p148
        $region54: #{tpu_custom_call.1} parent=31 // pred_check_branch
          %1326 = sbr.rel (%p1324) target = $region56
        $region55: #{tpu_custom_call.1} parent=31 // pred_region
          %s1327 = smul.u32 16, %s42
          %s1329 = ssub.s32 1024, 1024
          %1330 = vsyncadd %s1299, %s1329
          %s1331 = smul.addr %s1327, 64
          %s1332 = scalar_lea.hbm %s3, %s1331
          %s1333 = sshll.u32 %s1302, 4
          %s1334 = int_to_ptr.vmem [resolvable:$true] %s1333
          %1339 = dma.vmem_to_hbm [thread:$0]  %s1334, 1024, %s1332, %s1299, 64, 64, 4
        $region56: #{tpu_custom_call.1} parent=31 // pred_fallthru
          _
        // Predicated region
        $region57: #{tpu_custom_call.1} parent=31 // pred_check
          %p1340 = pneg %p174
        $region58: #{tpu_custom_call.1} parent=31 // pred_check_branch
          %1342 = sbr.rel (%p1340) target = $region60
        $region59: #{tpu_custom_call.1} parent=31 // pred_region
          %s1343 = smul.u32 16, %s42
          %s1345 = ssub.s32 1024, 1024
          %1346 = vsyncadd %s1304, %s1345
          %s1347 = smul.addr %s1343, 64
          %s1348 = scalar_lea.hbm %s4, %s1347
          %s1349 = sshll.u32 %s1307, 4
          %s1350 = int_to_ptr.vmem [resolvable:$true] %s1349
          %1355 = dma.vmem_to_hbm [thread:$0]  %s1350, 1024, %s1348, %s1304, 64, 64, 4
        $region60: #{tpu_custom_call.1} parent=31 // pred_fallthru
          _
        // Predicated region
        $region61: #{tpu_custom_call.1} parent=31 // pred_check
          %p1356 = pneg %p200
        $region62: #{tpu_custom_call.1} parent=31 // pred_check_branch
          %1358 = sbr.rel (%p1356) target = $region64
        $region63: #{tpu_custom_call.1} parent=31 // pred_region
          %s1360 = ssub.s32 16, 16
          %1361 = vsyncadd %s1309, %s1360
          %s1362 = smul.addr %s42, 16
          %s1363 = scalar_lea.hbm %s5, %s1362
          %s1365 = sshll.u32 %s1311, 4
          %s1366 = int_to_ptr.vmem [resolvable:$true] %s1365
          %1368 = dma.vmem_to_hbm [thread:$0]  %s1366, 16, %s1363, %s1309
        $region64: #{tpu_custom_call.1} parent=31 // pred_fallthru
          _
        // Predicated region
        $region65: #{tpu_custom_call.1} parent=31 // pred_check
          %p1369 = pneg %p226
        $region66: #{tpu_custom_call.1} parent=31 // pred_check_branch
          %1371 = sbr.rel (%p1369) target = $region68
        $region67: #{tpu_custom_call.1} parent=31 // pred_region
          %s1373 = ssub.s32 16, 16
          %1374 = vsyncadd %s1313, %s1373
          %s1375 = smul.addr %s42, 16
          %s1376 = scalar_lea.hbm %s6, %s1375
          %s1378 = sshll.u32 %s1315, 4
          %s1379 = int_to_ptr.vmem [resolvable:$true] %s1378
          %1381 = dma.vmem_to_hbm [thread:$0]  %s1379, 16, %s1376, %s1313
        $region68: #{tpu_custom_call.1} parent=31 // pred_fallthru
          _
        // Predicated region
        $region69: #{tpu_custom_call.1} parent=31 // pred_check
          %p1382 = pneg %p252
        $region70: #{tpu_custom_call.1} parent=31 // pred_check_branch
          %1384 = sbr.rel (%p1382) target = $region72
        $region71: #{tpu_custom_call.1} parent=31 // pred_region
          %s1386 = ssub.s32 16, 16
          %1387 = vsyncadd %s1317, %s1386
          %s1388 = smul.addr %s42, 16
          %s1389 = scalar_lea.hbm %s7, %s1388
          %s1391 = sshll.u32 %s1319, 4
          %s1392 = int_to_ptr.vmem [resolvable:$true] %s1391
          %1394 = dma.vmem_to_hbm [thread:$0]  %s1392, 16, %s1389, %s1317
        $region72: #{tpu_custom_call.1} parent=31 // pred_fallthru
          _
        // Predicated region
        $region73: #{tpu_custom_call.1} parent=31 // pred_check
          %p1395 = pneg %p278
        $region74: #{tpu_custom_call.1} parent=31 // pred_check_branch
          %1397 = sbr.rel (%p1395) target = $region76
        $region75: #{tpu_custom_call.1} parent=31 // pred_region
          %s1399 = ssub.s32 16, 16
          %1400 = vsyncadd %s1321, %s1399
          %s1401 = smul.addr %s42, 16
          %s1402 = scalar_lea.hbm %s8, %s1401
          %s1404 = sshll.u32 %s1323, 4
          %s1405 = int_to_ptr.vmem [resolvable:$true] %s1404
          %1407 = dma.vmem_to_hbm [thread:$0]  %s1405, 16, %s1402, %s1321
        $region76: #{tpu_custom_call.1} parent=31 // pred_fallthru
          _
      $region32: #{tpu_custom_call.1} parent=5 // pred_fallthru
        _
      %p1408 = scmp.le.s32.totalorder 2, %s33
      // Predicated region
      $region77: #{tpu_custom_call.1} parent=5 // pred_check
        %p1409 = pneg %p1408
      $region78: #{tpu_custom_call.1} parent=5 // pred_check_branch
        %1411 = sbr.rel (%p1409) target = $region80
      $region79: #{tpu_custom_call.1} parent=5 // pred_region
        %s1412 = ssub.s32 %s33, 2
        // Predicated region
        $region81: #{tpu_custom_call.1} parent=79 // pred_check
          %p1413 = pneg %p154
        $region82: #{tpu_custom_call.1} parent=79 // pred_check_branch
          %1415 = sbr.rel (%p1413) target = $region84
        $region83: #{tpu_custom_call.1} parent=79 // pred_region
          %s1416 = sand.u32 %s139, 1
          %s1417 = scalar_lea.sflag [#allocation6], %s1416
          %s1418 = sand.u32 %s139, 1
          %s1419 = smul.addr %s1418, 64
          %s1420 = scalar_lea.vmem [#allocation10], %s1419
          %1421 = dma.done %s1417, 1024
        $region84: #{tpu_custom_call.1} parent=79 // pred_fallthru
          _
        // Predicated region
        $region85: #{tpu_custom_call.1} parent=79 // pred_check
          %p1422 = pneg %p180
        $region86: #{tpu_custom_call.1} parent=79 // pred_check_branch
          %1424 = sbr.rel (%p1422) target = $region88
        $region87: #{tpu_custom_call.1} parent=79 // pred_region
          %s1425 = sand.u32 %s39, 1
          %s1426 = scalar_lea.sflag [#allocation12], %s1425
          %s1427 = sand.u32 %s165, 1
          %s1428 = smul.addr %s1427, 64
          %s1429 = scalar_lea.vmem [#allocation11], %s1428
          %1430 = dma.done %s1426, 1024
        $region88: #{tpu_custom_call.1} parent=79 // pred_fallthru
          _
        // Predicated region
        $region89: #{tpu_custom_call.1} parent=79 // pred_check
          %p1431 = pneg %p206
        $region90: #{tpu_custom_call.1} parent=79 // pred_check_branch
          %1433 = sbr.rel (%p1431) target = $region92
        $region91: #{tpu_custom_call.1} parent=79 // pred_region
          %s1434 = sand.u32 %s39, 1
          %s1435 = scalar_lea.sflag [#allocation12], %s1434
          %s1436 = sand.u32 %s191, 1
          %s1437 = scalar_lea.vmem [#allocation13], %s1436
          %1438 = dma.done %s1435, 16
        $region92: #{tpu_custom_call.1} parent=79 // pred_fallthru
          _
        // Predicated region
        $region93: #{tpu_custom_call.1} parent=79 // pred_check
          %p1439 = pneg %p232
        $region94: #{tpu_custom_call.1} parent=79 // pred_check_branch
          %1441 = sbr.rel (%p1439) target = $region96
        $region95: #{tpu_custom_call.1} parent=79 // pred_region
          %s1442 = sand.u32 %s39, 1
          %s1443 = scalar_lea.sflag [#allocation15], %s1442
          %s1444 = sand.u32 %s217, 1
          %s1445 = scalar_lea.vmem [#allocation14], %s1444
          %1446 = dma.done %s1443, 16
        $region96: #{tpu_custom_call.1} parent=79 // pred_fallthru
          _
        // Predicated region
        $region97: #{tpu_custom_call.1} parent=79 // pred_check
          %p1447 = pneg %p258
        $region98: #{tpu_custom_call.1} parent=79 // pred_check_branch
          %1449 = sbr.rel (%p1447) target = $region100
        $region99: #{tpu_custom_call.1} parent=79 // pred_region
          %s1450 = sand.u32 %s39, 1
          %s1451 = scalar_lea.sflag [#allocation15], %s1450
          %s1452 = sand.u32 %s243, 1
          %s1453 = scalar_lea.vmem [#allocation16], %s1452
          %1454 = dma.done %s1451, 16
        $region100: #{tpu_custom_call.1} parent=79 // pred_fallthru
          _
        // Predicated region
        $region101: #{tpu_custom_call.1} parent=79 // pred_check
          %p1455 = pneg %p284
        $region102: #{tpu_custom_call.1} parent=79 // pred_check_branch
          %1457 = sbr.rel (%p1455) target = $region104
        $region103: #{tpu_custom_call.1} parent=79 // pred_region
          %s1458 = sand.u32 %s269, 1
          %s1459 = scalar_lea.sflag [#allocation18], %s1458
          %s1460 = sand.u32 %s269, 1
          %s1461 = scalar_lea.vmem [#allocation17], %s1460
          %1462 = dma.done %s1459, 16
        $region104: #{tpu_custom_call.1} parent=79 // pred_fallthru
          _
      $region80: #{tpu_custom_call.1} parent=5 // pred_fallthru
        _
    $region6: #{tpu_custom_call.1} parent=1 // loop_footer
      %s37 = sadd.s32 1, %s33
    $region7: #{tpu_custom_call.1} parent=1 // loop_footer_branch
      %32 = sbr.rel target = $region3
    $region8: #{tpu_custom_call.1} parent=1 // loop_exit
      _
    %1463 = vsyncpa [#allocation5], 1
    %s1464 = scalar_lea.sflag [#allocation5], 1
    %1465 = vsyncpa %s1464, 1
    %1466 = vsyncpa [#allocation8], 1
    %s1467 = scalar_lea.sflag [#allocation8], 1
    %1468 = vsyncpa %s1467, 1
    %1469 = vsyncpa [#allocation6], 1
    %s1470 = scalar_lea.sflag [#allocation6], 1
    %1471 = vsyncpa %s1470, 1
    %1472 = vsyncpa [#allocation12], 1
    %s1473 = scalar_lea.sflag [#allocation12], 1
    %1474 = vsyncpa %s1473, 1
    %1475 = vsyncpa [#allocation15], 1
    %s1476 = scalar_lea.sflag [#allocation15], 1
    %1477 = vsyncpa %s1476, 1
    %1478 = vsyncpa [#allocation18], 1
    %s1479 = scalar_lea.sflag [#allocation18], 1
    %1480 = vsyncpa %s1479, 1

</llo_original>
